<compile_context>
chip_gen: v6e
topology: v6e:2x2x1
jax: 0.10.0
libtpu: 0.0.40
codegen_flags: <defaults>
</compile_context>

<pallas_src>
import numpy as np
import jax
import jax.numpy as jnp
from jax import lax
from jax.experimental import pallas as pl
from jax.experimental.pallas import tpu as pltpu

NEG_SLOPE = 0.1  # PyTorch F.leaky_relu default in SuperSloMo blocks


# --------------------------------------------------------------------------
# Host-side helpers: upsample interpolation matrix + weight re-layout.
# --------------------------------------------------------------------------
def _upsample_matrix_1d(out_size, in_size):
    """(out_size, in_size) matrix reproducing PyTorch bilinear x2 upsampling
    (align_corners=False) along one axis."""
    d = np.arange(out_size, dtype=np.float64)
    src = np.maximum((d + 0.5) * in_size / out_size - 0.5, 0.0)
    lo = np.minimum(np.floor(src).astype(np.int64), in_size - 1)
    hi = np.minimum(lo + 1, in_size - 1)
    frac = src - lo
    m = np.zeros((out_size, in_size), dtype=np.float64)
    m[np.arange(out_size), lo] += 1.0 - frac
    m[np.arange(out_size), hi] += frac
    return m.astype(np.float32)


def _flatten_conv_weight(w_oihw):
    """(O, I, 3, 3) OIHW -> (9*I, O), tap-major (kh*3+kw) then input channel."""
    o, i = w_oihw.shape[0], w_oihw.shape[1]
    return jnp.transpose(w_oihw, (2, 3, 1, 0)).reshape(9 * i, o)


def prepare_de_block_params(w1_oihw, b1, w2_oihw, b2, hin, win):
    """Convert PyTorch-layout DE_Block parameters into the kernel layout."""
    cout = w1_oihw.shape[0]
    h, w = 2 * hin, 2 * win
    u = jnp.asarray(np.kron(_upsample_matrix_1d(h, hin),
                            _upsample_matrix_1d(w, win)))       # (H*W, Hin*Win)
    return (u,
            _flatten_conv_weight(w1_oihw),                      # (9*Cin,  Cout)
            b1.reshape(1, cout),
            _flatten_conv_weight(w2_oihw[:, :cout]),            # (9*Cout, Cout) y1 part
            _flatten_conv_weight(w2_oihw[:, cout:]),            # (9*Cout, Cout) skip part
            b2.reshape(1, cout))


# --------------------------------------------------------------------------
# Pallas kernel: one fully fused DE_Block (upsample + conv1 + concat + conv2).
# --------------------------------------------------------------------------
def _make_de_block_kernel(h, w, compute_dtype):
    hw = h * w

    def _shift_tap(arr, dh, dw, col_idx):
        # arr: (HW, C) row-major spatial. Returns the 3x3-conv tap at offset
        # (dh, dw) with zero padding, i.e. tap[p=(i,j)] = arr[(i+dh, j+dw)] or 0.
        c = arr.shape[1]
        s = dh * w + dw
        if s > 0:
            shifted = jnp.concatenate(
                [arr[s:, :], jnp.zeros((s, c), arr.dtype)], axis=0)
        elif s < 0:
            shifted = jnp.concatenate(
                [jnp.zeros((-s, c), arr.dtype), arr[:hw + s, :]], axis=0)
        else:
            shifted = arr
        if dw == 1:      # output column W-1 would read column 0 of the next row
            shifted = jnp.where(col_idx < w - 1, shifted, jnp.zeros_like(shifted))
        elif dw == -1:   # output column 0 would read column W-1 of previous row
            shifted = jnp.where(col_idx > 0, shifted, jnp.zeros_like(shifted))
        return shifted

    def _im2col(arr, col_idx):
        # (HW, C) -> (HW, 9*C): 9 taps concatenated tap-major along channels so a
        # 3x3/pad-1 conv becomes ONE MXU matmul with K = 9*C.
        taps = [_shift_tap(arr, kh - 1, kw - 1, col_idx)
                for kh in range(3) for kw in range(3)]
        return jnp.concatenate(taps, axis=-1)

    def kernel(x_ref, skip_ref, u_ref, w1_ref, b1_ref, w2a_ref, w2b_ref, b2_ref,
               o_ref):
        cdt = compute_dtype
        col_idx = jnp.mod(lax.broadcasted_iota(jnp.int32, (hw, 1), 0), w)

        # ---- bilinear x2 upsample: one MXU matmul with the precomputed matrix.
        # x arrives channel-major (Cin, Hin*Win);  up = U @ x.T -> (HW, Cin).
        up = jnp.dot(u_ref[...].astype(cdt), x_ref[0].astype(cdt).T,
                     preferred_element_type=jnp.float32)             # (HW, Cin)

        # ---- conv1 (3x3, pad 1) + LeakyReLU: single fused matmul, K = 9*Cin.
        cols1 = _im2col(up.astype(cdt), col_idx)                     # (HW, 9*Cin)
        y1 = jnp.dot(cols1, w1_ref[...].astype(cdt),
                     preferred_element_type=jnp.float32)             # (HW, Cout)
        y1 = y1 + b1_ref[...]
        y1 = jnp.where(y1 > 0, y1, NEG_SLOPE * y1)

        # ---- conv2 over cat([y1, skip], channel) without materializing the
        # concat: weight is pre-split, the two partial matmuls are summed.
        skip_rm = skip_ref[0].T                                      # (HW, Cout)
        cols2a = _im2col(y1.astype(cdt), col_idx)                    # (HW, 9*Cout)
        cols2b = _im2col(skip_rm.astype(cdt), col_idx)               # (HW, 9*Cout)
        y2 = (jnp.dot(cols2a, w2a_ref[...].astype(cdt),
                      preferred_element_type=jnp.float32) +
              jnp.dot(cols2b, w2b_ref[...].astype(cdt),
                      preferred_element_type=jnp.float32))           # (HW, Cout)
        y2 = y2 + b2_ref[...]
        y2 = jnp.where(y2 > 0, y2, NEG_SLOPE * y2)

        # ---- lane-dense store: channels in sublanes, H*W on the 128-lane axis.
        o_ref[0] = y2.T.astype(o_ref.dtype)

    return kernel


def de_block_pallas(x_flat, skip_flat, params, *, h, w,
                    compute_dtype=jnp.float32):
    """One fused DE_Block.  x_flat: (N, Cin, Hin*Win), skip_flat: (N, Cout, H*W)
    (both flattened NCHW).  Returns (N, Cout, H*W)."""
    n, cin, hw_in = x_flat.shape
    _, cout, hw = skip_flat.shape
    assert hw == h * w and hw_in * 4 == hw
    u, w1, b1, w2a, w2b, b2 = params

    kernel = _make_de_block_kernel(h, w, compute_dtype)
    # TODO(synk): at production SuperSloMo sizes (C up to 512, H,W up to 352) add an
    # HW-tile grid axis + vmem_limit_bytes so double-buffered blocks fit v7x's VMEM.
    return pl.pallas_call(
        kernel,
        out_shape=jax.ShapeDtypeStruct((n, cout, hw), jnp.float32),
        grid_spec=pltpu.PrefetchScalarGridSpec(
            num_scalar_prefetch=0,
            grid=(n,),
            in_specs=[
                pl.BlockSpec((1, cin, hw_in), lambda i: (i, 0, 0)),   # x
                pl.BlockSpec((1, cout, hw), lambda i: (i, 0, 0)),     # skip
                pl.BlockSpec((hw, hw_in), lambda i: (0, 0)),          # upsample matrix
                pl.BlockSpec((9 * cin, cout), lambda i: (0, 0)),      # w1
                pl.BlockSpec((1, cout), lambda i: (0, 0)),            # b1
                pl.BlockSpec((9 * cout, cout), lambda i: (0, 0)),     # w2 (y1 part)
                pl.BlockSpec((9 * cout, cout), lambda i: (0, 0)),     # w2 (skip part)
                pl.BlockSpec((1, cout), lambda i: (0, 0)),            # b2
            ],
            out_specs=pl.BlockSpec((1, cout, hw), lambda i: (i, 0, 0)),
        ),
        compiler_params=pltpu.CompilerParams(
            dimension_semantics=("parallel",)),
    )(x_flat, skip_flat, u, w1, b1, w2a, w2b, b2)


def decoder_pallas(inputs_nchw, block_params, compute_dtype=jnp.float32):
    """inputs_nchw: [x1, x2, x3, x4] encoder features in PyTorch NCHW layout.
    Returns the decoder output in NCHW.  Only free reshapes happen outside the
    three fused DE_Block kernels."""
    def flat(t):
        n, c, hh, ww = t.shape
        return t.reshape(n, c, hh * ww)

    x = flat(inputs_nchw[3])
    for skip_nchw, params in zip(
            [inputs_nchw[2], inputs_nchw[1], inputs_nchw[0]], block_params):
        _, _, hh, ww = skip_nchw.shape
        x = de_block_pallas(x, flat(skip_nchw), params, h=hh, w=ww,
                            compute_dtype=compute_dtype)
    n, c, _ = x.shape
    hh, ww = inputs_nchw[0].shape[2], inputs_nchw[0].shape[3]
    return x.reshape(n, c, hh, ww)


# -------------------------- pure-JAX reference -------------------------------
def _leaky(x):
    return jnp.where(x > 0, x, NEG_SLOPE * x)


def _upsample_ref(x):
    """F.interpolate(scale_factor=2, mode='bilinear', align_corners=False), NCHW."""
    n, c, h, w = x.shape

    def idx(out_size, in_size):
        d = jnp.arange(out_size, dtype=jnp.float32)
        src = jnp.maximum((d + 0.5) / 2.0 - 0.5, 0.0)
        lo = jnp.minimum(jnp.floor(src).astype(jnp.int32), in_size - 1)
        hi = jnp.minimum(lo + 1, in_size - 1)
        return lo, hi, src - lo.astype(jnp.float32)

    hl, hh, hf = idx(2 * h, h)
    wl, wh, wf = idx(2 * w, w)
    rows = (x[:, :, hl, :] * (1.0 - hf)[None, None, :, None]
            + x[:, :, hh, :] * hf[None, None, :, None])
    return rows[:, :, :, wl] * (1.0 - wf) + rows[:, :, :, wh] * wf


def _conv_ref(x, w_oihw, b):
    y = lax.conv_general_dilated(x, w_oihw, (1, 1), "SAME",
                                 dimension_numbers=("NCHW", "OIHW", "NCHW"))
    return _leaky(y + b[None, :, None, None])


def decoder_ref(inputs_nchw, torch_params):
    x = inputs_nchw[3]
    for skip, (w1, b1, w2, b2) in zip(
            [inputs_nchw[2], inputs_nchw[1], inputs_nchw[0]], torch_params):
        x = _upsample_ref(x)
        x = _conv_ref(x, w1, b1)
        x = _conv_ref(jnp.concatenate([x, skip], axis=1), w2, b2)
    return x


# ------------------------------ parameters -----------------------------------
def init_conv(key, cin, cout):
    kw_, kb = jax.random.split(key)
    bound = (1.0 / (cin * 9)) ** 0.5  # PyTorch Conv2d default-init bound
    w = jax.random.uniform(kw_, (cout, cin, 3, 3), minval=-bound, maxval=bound,
                           dtype=jnp.float32)                        # OIHW
    b = jax.random.uniform(kb, (cout,), minval=-bound, maxval=bound,
                           dtype=jnp.float32)
    return w, b


if __name__ == "__main__":
    channels = [4, 8, 16, 32]
    N, S = 2, 16
    key = jax.random.PRNGKey(0)
    keys = jax.random.split(key, 16)

    # Encoder feature maps in PyTorch NCHW convention (input[0] .. input[3]).
    shapes_nchw = [
        (N, channels[0], S, S),
        (N, channels[1], S // 2, S // 2),
        (N, channels[2], S // 4, S // 4),
        (N, channels[3], S // 8, S // 8),
    ]
    inputs_nchw = [jax.random.normal(keys[i], s, dtype=jnp.float32)
                   for i, s in enumerate(shapes_nchw)]

    torch_params, block_params = [], []
    pk = 4
    for bi, (cin, cout) in enumerate([(channels[3], channels[2]),
                                      (channels[2], channels[1]),
                                      (channels[1], channels[0])]):
        w1, b1 = init_conv(keys[pk], cin, cout); pk += 1
        w2, b2 = init_conv(keys[pk], 2 * cout, cout); pk += 1
        torch_params.append((w1, b1, w2, b2))
        hin, win = shapes_nchw[3 - bi][2], shapes_nchw[3 - bi][3]  # x-input spatial
        block_params.append(prepare_de_block_params(w1, b1, w2, b2, hin, win))

    out_nchw = decoder_pallas(inputs_nchw, block_params)
    jax.block_until_ready(out_nchw)
    assert out_nchw.shape == (N, channels[0], S, S)

    ref_nchw = decoder_ref(inputs_nchw, torch_params)
    np.testing.assert_allclose(np.asarray(out_nchw), np.asarray(ref_nchw),
                               rtol=1e-4, atol=1e-4)
    print("KERNEL_OK")
</pallas_src>

<mosaic_0001>
module attributes {stable_mosaic.version = 11 : i64} {
  func.func @kernel(%arg0: i32, %arg1: memref<1x32x4xf32, #tpu.memory_space<vmem>>, %arg2: memref<1x16x16xf32, #tpu.memory_space<vmem>>, %arg3: memref<16x4xf32, #tpu.memory_space<vmem>>, %arg4: memref<288x16xf32, #tpu.memory_space<vmem>>, %arg5: memref<1x16xf32, #tpu.memory_space<vmem>>, %arg6: memref<144x16xf32, #tpu.memory_space<vmem>>, %arg7: memref<144x16xf32, #tpu.memory_space<vmem>>, %arg8: memref<1x16xf32, #tpu.memory_space<vmem>>, %arg9: memref<1x16x16xf32, #tpu.memory_space<vmem>>) attributes {dimension_semantics = [#tpu.dimension_semantics<parallel>], iteration_bounds = array<i64: 2>, scalar_prefetch = 0 : i64, scratch_operands = 0 : i64, tpu.core_type = #tpu.core_type<tc>, window_params = [{transform_indices = @transform_0, window_bounds = array<i64: 1, 32, 4>}, {transform_indices = @transform_1, window_bounds = array<i64: 1, 16, 16>}, {pipeline_mode = #tpu.pipeline_mode<synchronous>, transform_indices = @transform_2, window_bounds = array<i64: 16, 4>}, {pipeline_mode = #tpu.pipeline_mode<synchronous>, transform_indices = @transform_3, window_bounds = array<i64: 288, 16>}, {pipeline_mode = #tpu.pipeline_mode<synchronous>, transform_indices = @transform_4, window_bounds = array<i64: 1, 16>}, {pipeline_mode = #tpu.pipeline_mode<synchronous>, transform_indices = @transform_5, window_bounds = array<i64: 144, 16>}, {pipeline_mode = #tpu.pipeline_mode<synchronous>, transform_indices = @transform_6, window_bounds = array<i64: 144, 16>}, {pipeline_mode = #tpu.pipeline_mode<synchronous>, transform_indices = @transform_7, window_bounds = array<i64: 1, 16>}, {transform_indices = @transform_8, window_bounds = array<i64: 1, 16, 16>}]} {
    %0 = tpu.iota {dimensions = array<i32: 0>} : vector<16x1xi32>
    %c4_i32 = arith.constant 4 : i32
    %c0_i32 = arith.constant 0 : i32
    %1 = arith.cmpi eq, %c4_i32, %c0_i32 : i32
    %c1_i32 = arith.constant 1 : i32
    %2 = arith.select %1, %c1_i32, %c4_i32 : i32
    %3 = vector.broadcast %2 : i32 to vector<16x1xi32>
    %4 = arith.remsi %0, %3 : vector<16x1xi32>
    %c0_i32_0 = arith.constant 0 : i32
    %5 = vector.broadcast %c0_i32_0 : i32 to vector<16x1xi32>
    %6 = arith.cmpi ne, %4, %5 : vector<16x1xi32>
    %c0_i32_1 = arith.constant 0 : i32
    %7 = vector.broadcast %c0_i32_1 : i32 to vector<16x1xi32>
    %8 = arith.cmpi slt, %4, %7 : vector<16x1xi32>
    %c0_i32_2 = arith.constant 0 : i32
    %9 = arith.cmpi slt, %2, %c0_i32_2 : i32
    %10 = vector.broadcast %9 : i1 to vector<16x1xi1>
    %11 = vector.broadcast %10 : vector<16x1xi1> to vector<16x1xi1>
    %12 = arith.xori %8, %11 : vector<16x1xi1>
    %13 = arith.andi %12, %6 : vector<16x1xi1>
    %14 = vector.broadcast %2 : i32 to vector<16x1xi32>
    %15 = arith.addi %4, %14 : vector<16x1xi32>
    %16 = arith.select %13, %15, %4 : vector<16x1xi1>, vector<16x1xi32>
    %c0 = arith.constant 0 : index
    %c0_3 = arith.constant 0 : index
    %17 = vector.load %arg3[%c0, %c0_3] : memref<16x4xf32, #tpu.memory_space<vmem>>, vector<16x4xf32>
    %c0_4 = arith.constant 0 : index
    %c0_5 = arith.constant 0 : index
    %c0_6 = arith.constant 0 : index
    %18 = vector.load %arg1[%c0_4, %c0_5, %c0_6] : memref<1x32x4xf32, #tpu.memory_space<vmem>>, vector<1x32x4xf32>
    %19 = vector.shape_cast %18 : vector<1x32x4xf32> to vector<32x4xf32>
    %20 = tpu.transpose %19, [1, 0] : vector<32x4xf32> -> vector<4x32xf32>
    %cst = arith.constant dense<0.000000e+00> : vector<16x32xf32>
    %21 = tpu.matmul %17, %20, %cst {dimension_numbers = #tpu.dot_dimension_numbers<[1], [0], [0], [1], [0, 0, 1, 1], [], []>} : vector<16x4xf32>, vector<4x32xf32>, vector<16x32xf32> -> vector<16x32xf32>
    %cst_7 = arith.constant 0.000000e+00 : f32
    %22 = vector.broadcast %cst_7 : f32 to vector<5x32xf32>
    %23 = vector.extract_strided_slice %21 {offsets = [0, 0], sizes = [11, 32], strides = [1, 1]} : vector<16x32xf32> to vector<11x32xf32>
    %24 = tpu.concatenate %22, %23 in 0 : vector<5x32xf32>, vector<11x32xf32> -> vector<16x32xf32>
    %c0_i32_8 = arith.constant 0 : i32
    %25 = vector.broadcast %c0_i32_8 : i32 to vector<16x1xi32>
    %26 = arith.cmpi sgt, %16, %25 : vector<16x1xi32>
    %cst_9 = arith.constant 0.000000e+00 : f32
    %27 = vector.broadcast %cst_9 : f32 to vector<16x32xf32>
    %28 = vector.shape_cast %26 : vector<16x1xi1> to vector<16x1xi1>
    %29 = vector.broadcast %28 : vector<16x1xi1> to vector<16x32xi1>
    %30 = arith.select %29, %24, %27 : vector<16x32xi1>, vector<16x32xf32>
    %cst_10 = arith.constant 0.000000e+00 : f32
    %31 = vector.broadcast %cst_10 : f32 to vector<4x32xf32>
    %32 = vector.extract_strided_slice %21 {offsets = [0, 0], sizes = [12, 32], strides = [1, 1]} : vector<16x32xf32> to vector<12x32xf32>
    %33 = tpu.concatenate %31, %32 in 0 : vector<4x32xf32>, vector<12x32xf32> -> vector<16x32xf32>
    %cst_11 = arith.constant 0.000000e+00 : f32
    %34 = vector.broadcast %cst_11 : f32 to vector<3x32xf32>
    %35 = vector.extract_strided_slice %21 {offsets = [0, 0], sizes = [13, 32], strides = [1, 1]} : vector<16x32xf32> to vector<13x32xf32>
    %36 = tpu.concatenate %34, %35 in 0 : vector<3x32xf32>, vector<13x32xf32> -> vector<16x32xf32>
    %c3_i32 = arith.constant 3 : i32
    %37 = vector.broadcast %c3_i32 : i32 to vector<16x1xi32>
    %38 = arith.cmpi slt, %16, %37 : vector<16x1xi32>
    %cst_12 = arith.constant 0.000000e+00 : f32
    %39 = vector.broadcast %cst_12 : f32 to vector<16x32xf32>
    %40 = vector.shape_cast %38 : vector<16x1xi1> to vector<16x1xi1>
    %41 = vector.broadcast %40 : vector<16x1xi1> to vector<16x32xi1>
    %42 = arith.select %41, %36, %39 : vector<16x32xi1>, vector<16x32xf32>
    %cst_13 = arith.constant 0.000000e+00 : f32
    %43 = vector.broadcast %cst_13 : f32 to vector<1x32xf32>
    %44 = vector.extract_strided_slice %21 {offsets = [0, 0], sizes = [15, 32], strides = [1, 1]} : vector<16x32xf32> to vector<15x32xf32>
    %45 = tpu.concatenate %43, %44 in 0 : vector<1x32xf32>, vector<15x32xf32> -> vector<16x32xf32>
    %c0_i32_14 = arith.constant 0 : i32
    %46 = vector.broadcast %c0_i32_14 : i32 to vector<16x1xi32>
    %47 = arith.cmpi sgt, %16, %46 : vector<16x1xi32>
    %cst_15 = arith.constant 0.000000e+00 : f32
    %48 = vector.broadcast %cst_15 : f32 to vector<16x32xf32>
    %49 = vector.shape_cast %47 : vector<16x1xi1> to vector<16x1xi1>
    %50 = vector.broadcast %49 : vector<16x1xi1> to vector<16x32xi1>
    %51 = arith.select %50, %45, %48 : vector<16x32xi1>, vector<16x32xf32>
    %52 = vector.extract_strided_slice %21 {offsets = [1, 0], sizes = [15, 32], strides = [1, 1]} : vector<16x32xf32> to vector<15x32xf32>
    %cst_16 = arith.constant 0.000000e+00 : f32
    %53 = vector.broadcast %cst_16 : f32 to vector<1x32xf32>
    %54 = tpu.concatenate %52, %53 in 0 : vector<15x32xf32>, vector<1x32xf32> -> vector<16x32xf32>
    %c3_i32_17 = arith.constant 3 : i32
    %55 = vector.broadcast %c3_i32_17 : i32 to vector<16x1xi32>
    %56 = arith.cmpi slt, %16, %55 : vector<16x1xi32>
    %cst_18 = arith.constant 0.000000e+00 : f32
    %57 = vector.broadcast %cst_18 : f32 to vector<16x32xf32>
    %58 = vector.shape_cast %56 : vector<16x1xi1> to vector<16x1xi1>
    %59 = vector.broadcast %58 : vector<16x1xi1> to vector<16x32xi1>
    %60 = arith.select %59, %54, %57 : vector<16x32xi1>, vector<16x32xf32>
    %61 = vector.extract_strided_slice %21 {offsets = [3, 0], sizes = [13, 32], strides = [1, 1]} : vector<16x32xf32> to vector<13x32xf32>
    %cst_19 = arith.constant 0.000000e+00 : f32
    %62 = vector.broadcast %cst_19 : f32 to vector<3x32xf32>
    %63 = tpu.concatenate %61, %62 in 0 : vector<13x32xf32>, vector<3x32xf32> -> vector<16x32xf32>
    %c0_i32_20 = arith.constant 0 : i32
    %64 = vector.broadcast %c0_i32_20 : i32 to vector<16x1xi32>
    %65 = arith.cmpi sgt, %16, %64 : vector<16x1xi32>
    %cst_21 = arith.constant 0.000000e+00 : f32
    %66 = vector.broadcast %cst_21 : f32 to vector<16x32xf32>
    %67 = vector.shape_cast %65 : vector<16x1xi1> to vector<16x1xi1>
    %68 = vector.broadcast %67 : vector<16x1xi1> to vector<16x32xi1>
    %69 = arith.select %68, %63, %66 : vector<16x32xi1>, vector<16x32xf32>
    %70 = vector.extract_strided_slice %21 {offsets = [4, 0], sizes = [12, 32], strides = [1, 1]} : vector<16x32xf32> to vector<12x32xf32>
    %cst_22 = arith.constant 0.000000e+00 : f32
    %71 = vector.broadcast %cst_22 : f32 to vector<4x32xf32>
    %72 = tpu.concatenate %70, %71 in 0 : vector<12x32xf32>, vector<4x32xf32> -> vector<16x32xf32>
    %73 = vector.extract_strided_slice %21 {offsets = [5, 0], sizes = [11, 32], strides = [1, 1]} : vector<16x32xf32> to vector<11x32xf32>
    %cst_23 = arith.constant 0.000000e+00 : f32
    %74 = vector.broadcast %cst_23 : f32 to vector<5x32xf32>
    %75 = tpu.concatenate %73, %74 in 0 : vector<11x32xf32>, vector<5x32xf32> -> vector<16x32xf32>
    %c3_i32_24 = arith.constant 3 : i32
    %76 = vector.broadcast %c3_i32_24 : i32 to vector<16x1xi32>
    %77 = arith.cmpi slt, %16, %76 : vector<16x1xi32>
    %cst_25 = arith.constant 0.000000e+00 : f32
    %78 = vector.broadcast %cst_25 : f32 to vector<16x32xf32>
    %79 = vector.shape_cast %77 : vector<16x1xi1> to vector<16x1xi1>
    %80 = vector.broadcast %79 : vector<16x1xi1> to vector<16x32xi1>
    %81 = arith.select %80, %75, %78 : vector<16x32xi1>, vector<16x32xf32>
    %82 = tpu.concatenate %30, %33, %42, %51, %21, %60, %69, %72, %81 in 1 : vector<16x32xf32>, vector<16x32xf32>, vector<16x32xf32>, vector<16x32xf32>, vector<16x32xf32>, vector<16x32xf32>, vector<16x32xf32>, vector<16x32xf32>, vector<16x32xf32> -> vector<16x288xf32>
    %c0_26 = arith.constant 0 : index
    %c0_27 = arith.constant 0 : index
    %83 = vector.load %arg4[%c0_26, %c0_27] : memref<288x16xf32, #tpu.memory_space<vmem>>, vector<288x16xf32>
    %cst_28 = arith.constant dense<0.000000e+00> : vector<16x16xf32>
    %84 = tpu.matmul %82, %83, %cst_28 {dimension_numbers = #tpu.dot_dimension_numbers<[1], [0], [0], [1], [0, 0, 1, 1], [], []>} : vector<16x288xf32>, vector<288x16xf32>, vector<16x16xf32> -> vector<16x16xf32>
    %c0_29 = arith.constant 0 : index
    %c0_30 = arith.constant 0 : index
    %85 = vector.load %arg5[%c0_29, %c0_30] : memref<1x16xf32, #tpu.memory_space<vmem>>, vector<1x16xf32>
    %86 = vector.broadcast %85 : vector<1x16xf32> to vector<16x16xf32>
    %87 = arith.addf %84, %86 : vector<16x16xf32>
    %cst_31 = arith.constant 0.000000e+00 : f32
    %88 = vector.broadcast %cst_31 : f32 to vector<16x16xf32>
    %89 = arith.cmpf ogt, %87, %88 : vector<16x16xf32>
    %cst_32 = arith.constant 1.000000e-01 : f32
    %90 = vector.broadcast %cst_32 : f32 to vector<16x16xf32>
    %91 = arith.mulf %90, %87 : vector<16x16xf32>
    %92 = arith.select %89, %87, %91 : vector<16x16xi1>, vector<16x16xf32>
    %c0_33 = arith.constant 0 : index
    %c0_34 = arith.constant 0 : index
    %c0_35 = arith.constant 0 : index
    %93 = vector.load %arg2[%c0_33, %c0_34, %c0_35] : memref<1x16x16xf32, #tpu.memory_space<vmem>>, vector<1x16x16xf32>
    %94 = vector.shape_cast %93 : vector<1x16x16xf32> to vector<16x16xf32>
    %95 = tpu.transpose %94, [1, 0] : vector<16x16xf32> -> vector<16x16xf32>
    %cst_36 = arith.constant 0.000000e+00 : f32
    %96 = vector.broadcast %cst_36 : f32 to vector<5x16xf32>
    %97 = vector.extract_strided_slice %92 {offsets = [0, 0], sizes = [11, 16], strides = [1, 1]} : vector<16x16xf32> to vector<11x16xf32>
    %98 = tpu.concatenate %96, %97 in 0 : vector<5x16xf32>, vector<11x16xf32> -> vector<16x16xf32>
    %c0_i32_37 = arith.constant 0 : i32
    %99 = vector.broadcast %c0_i32_37 : i32 to vector<16x1xi32>
    %100 = arith.cmpi sgt, %16, %99 : vector<16x1xi32>
    %cst_38 = arith.constant 0.000000e+00 : f32
    %101 = vector.broadcast %cst_38 : f32 to vector<16x16xf32>
    %102 = vector.shape_cast %100 : vector<16x1xi1> to vector<16x1xi1>
    %103 = vector.broadcast %102 : vector<16x1xi1> to vector<16x16xi1>
    %104 = arith.select %103, %98, %101 : vector<16x16xi1>, vector<16x16xf32>
    %cst_39 = arith.constant 0.000000e+00 : f32
    %105 = vector.broadcast %cst_39 : f32 to vector<4x16xf32>
    %106 = vector.extract_strided_slice %92 {offsets = [0, 0], sizes = [12, 16], strides = [1, 1]} : vector<16x16xf32> to vector<12x16xf32>
    %107 = tpu.concatenate %105, %106 in 0 : vector<4x16xf32>, vector<12x16xf32> -> vector<16x16xf32>
    %cst_40 = arith.constant 0.000000e+00 : f32
    %108 = vector.broadcast %cst_40 : f32 to vector<3x16xf32>
    %109 = vector.extract_strided_slice %92 {offsets = [0, 0], sizes = [13, 16], strides = [1, 1]} : vector<16x16xf32> to vector<13x16xf32>
    %110 = tpu.concatenate %108, %109 in 0 : vector<3x16xf32>, vector<13x16xf32> -> vector<16x16xf32>
    %c3_i32_41 = arith.constant 3 : i32
    %111 = vector.broadcast %c3_i32_41 : i32 to vector<16x1xi32>
    %112 = arith.cmpi slt, %16, %111 : vector<16x1xi32>
    %cst_42 = arith.constant 0.000000e+00 : f32
    %113 = vector.broadcast %cst_42 : f32 to vector<16x16xf32>
    %114 = vector.shape_cast %112 : vector<16x1xi1> to vector<16x1xi1>
    %115 = vector.broadcast %114 : vector<16x1xi1> to vector<16x16xi1>
    %116 = arith.select %115, %110, %113 : vector<16x16xi1>, vector<16x16xf32>
    %cst_43 = arith.constant 0.000000e+00 : f32
    %117 = vector.broadcast %cst_43 : f32 to vector<1x16xf32>
    %118 = vector.extract_strided_slice %92 {offsets = [0, 0], sizes = [15, 16], strides = [1, 1]} : vector<16x16xf32> to vector<15x16xf32>
    %119 = tpu.concatenate %117, %118 in 0 : vector<1x16xf32>, vector<15x16xf32> -> vector<16x16xf32>
    %c0_i32_44 = arith.constant 0 : i32
    %120 = vector.broadcast %c0_i32_44 : i32 to vector<16x1xi32>
    %121 = arith.cmpi sgt, %16, %120 : vector<16x1xi32>
    %cst_45 = arith.constant 0.000000e+00 : f32
    %122 = vector.broadcast %cst_45 : f32 to vector<16x16xf32>
    %123 = vector.shape_cast %121 : vector<16x1xi1> to vector<16x1xi1>
    %124 = vector.broadcast %123 : vector<16x1xi1> to vector<16x16xi1>
    %125 = arith.select %124, %119, %122 : vector<16x16xi1>, vector<16x16xf32>
    %126 = vector.extract_strided_slice %92 {offsets = [1, 0], sizes = [15, 16], strides = [1, 1]} : vector<16x16xf32> to vector<15x16xf32>
    %cst_46 = arith.constant 0.000000e+00 : f32
    %127 = vector.broadcast %cst_46 : f32 to vector<1x16xf32>
    %128 = tpu.concatenate %126, %127 in 0 : vector<15x16xf32>, vector<1x16xf32> -> vector<16x16xf32>
    %c3_i32_47 = arith.constant 3 : i32
    %129 = vector.broadcast %c3_i32_47 : i32 to vector<16x1xi32>
    %130 = arith.cmpi slt, %16, %129 : vector<16x1xi32>
    %cst_48 = arith.constant 0.000000e+00 : f32
    %131 = vector.broadcast %cst_48 : f32 to vector<16x16xf32>
    %132 = vector.shape_cast %130 : vector<16x1xi1> to vector<16x1xi1>
    %133 = vector.broadcast %132 : vector<16x1xi1> to vector<16x16xi1>
    %134 = arith.select %133, %128, %131 : vector<16x16xi1>, vector<16x16xf32>
    %135 = vector.extract_strided_slice %92 {offsets = [3, 0], sizes = [13, 16], strides = [1, 1]} : vector<16x16xf32> to vector<13x16xf32>
    %cst_49 = arith.constant 0.000000e+00 : f32
    %136 = vector.broadcast %cst_49 : f32 to vector<3x16xf32>
    %137 = tpu.concatenate %135, %136 in 0 : vector<13x16xf32>, vector<3x16xf32> -> vector<16x16xf32>
    %c0_i32_50 = arith.constant 0 : i32
    %138 = vector.broadcast %c0_i32_50 : i32 to vector<16x1xi32>
    %139 = arith.cmpi sgt, %16, %138 : vector<16x1xi32>
    %cst_51 = arith.constant 0.000000e+00 : f32
    %140 = vector.broadcast %cst_51 : f32 to vector<16x16xf32>
    %141 = vector.shape_cast %139 : vector<16x1xi1> to vector<16x1xi1>
    %142 = vector.broadcast %141 : vector<16x1xi1> to vector<16x16xi1>
    %143 = arith.select %142, %137, %140 : vector<16x16xi1>, vector<16x16xf32>
    %144 = vector.extract_strided_slice %92 {offsets = [4, 0], sizes = [12, 16], strides = [1, 1]} : vector<16x16xf32> to vector<12x16xf32>
    %cst_52 = arith.constant 0.000000e+00 : f32
    %145 = vector.broadcast %cst_52 : f32 to vector<4x16xf32>
    %146 = tpu.concatenate %144, %145 in 0 : vector<12x16xf32>, vector<4x16xf32> -> vector<16x16xf32>
    %147 = vector.extract_strided_slice %92 {offsets = [5, 0], sizes = [11, 16], strides = [1, 1]} : vector<16x16xf32> to vector<11x16xf32>
    %cst_53 = arith.constant 0.000000e+00 : f32
    %148 = vector.broadcast %cst_53 : f32 to vector<5x16xf32>
    %149 = tpu.concatenate %147, %148 in 0 : vector<11x16xf32>, vector<5x16xf32> -> vector<16x16xf32>
    %c3_i32_54 = arith.constant 3 : i32
    %150 = vector.broadcast %c3_i32_54 : i32 to vector<16x1xi32>
    %151 = arith.cmpi slt, %16, %150 : vector<16x1xi32>
    %cst_55 = arith.constant 0.000000e+00 : f32
    %152 = vector.broadcast %cst_55 : f32 to vector<16x16xf32>
    %153 = vector.shape_cast %151 : vector<16x1xi1> to vector<16x1xi1>
    %154 = vector.broadcast %153 : vector<16x1xi1> to vector<16x16xi1>
    %155 = arith.select %154, %149, %152 : vector<16x16xi1>, vector<16x16xf32>
    %156 = tpu.concatenate %104, %107, %116, %125, %92, %134, %143, %146, %155 in 1 : vector<16x16xf32>, vector<16x16xf32>, vector<16x16xf32>, vector<16x16xf32>, vector<16x16xf32>, vector<16x16xf32>, vector<16x16xf32>, vector<16x16xf32>, vector<16x16xf32> -> vector<16x144xf32>
    %cst_56 = arith.constant 0.000000e+00 : f32
    %157 = vector.broadcast %cst_56 : f32 to vector<5x16xf32>
    %158 = vector.extract_strided_slice %95 {offsets = [0, 0], sizes = [11, 16], strides = [1, 1]} : vector<16x16xf32> to vector<11x16xf32>
    %159 = tpu.concatenate %157, %158 in 0 : vector<5x16xf32>, vector<11x16xf32> -> vector<16x16xf32>
    %c0_i32_57 = arith.constant 0 : i32
    %160 = vector.broadcast %c0_i32_57 : i32 to vector<16x1xi32>
    %161 = arith.cmpi sgt, %16, %160 : vector<16x1xi32>
    %cst_58 = arith.constant 0.000000e+00 : f32
    %162 = vector.broadcast %cst_58 : f32 to vector<16x16xf32>
    %163 = vector.shape_cast %161 : vector<16x1xi1> to vector<16x1xi1>
    %164 = vector.broadcast %163 : vector<16x1xi1> to vector<16x16xi1>
    %165 = arith.select %164, %159, %162 : vector<16x16xi1>, vector<16x16xf32>
    %cst_59 = arith.constant 0.000000e+00 : f32
    %166 = vector.broadcast %cst_59 : f32 to vector<4x16xf32>
    %167 = vector.extract_strided_slice %95 {offsets = [0, 0], sizes = [12, 16], strides = [1, 1]} : vector<16x16xf32> to vector<12x16xf32>
    %168 = tpu.concatenate %166, %167 in 0 : vector<4x16xf32>, vector<12x16xf32> -> vector<16x16xf32>
    %cst_60 = arith.constant 0.000000e+00 : f32
    %169 = vector.broadcast %cst_60 : f32 to vector<3x16xf32>
    %170 = vector.extract_strided_slice %95 {offsets = [0, 0], sizes = [13, 16], strides = [1, 1]} : vector<16x16xf32> to vector<13x16xf32>
    %171 = tpu.concatenate %169, %170 in 0 : vector<3x16xf32>, vector<13x16xf32> -> vector<16x16xf32>
    %c3_i32_61 = arith.constant 3 : i32
    %172 = vector.broadcast %c3_i32_61 : i32 to vector<16x1xi32>
    %173 = arith.cmpi slt, %16, %172 : vector<16x1xi32>
    %cst_62 = arith.constant 0.000000e+00 : f32
    %174 = vector.broadcast %cst_62 : f32 to vector<16x16xf32>
    %175 = vector.shape_cast %173 : vector<16x1xi1> to vector<16x1xi1>
    %176 = vector.broadcast %175 : vector<16x1xi1> to vector<16x16xi1>
    %177 = arith.select %176, %171, %174 : vector<16x16xi1>, vector<16x16xf32>
    %cst_63 = arith.constant 0.000000e+00 : f32
    %178 = vector.broadcast %cst_63 : f32 to vector<1x16xf32>
    %179 = vector.extract_strided_slice %95 {offsets = [0, 0], sizes = [15, 16], strides = [1, 1]} : vector<16x16xf32> to vector<15x16xf32>
    %180 = tpu.concatenate %178, %179 in 0 : vector<1x16xf32>, vector<15x16xf32> -> vector<16x16xf32>
    %c0_i32_64 = arith.constant 0 : i32
    %181 = vector.broadcast %c0_i32_64 : i32 to vector<16x1xi32>
    %182 = arith.cmpi sgt, %16, %181 : vector<16x1xi32>
    %cst_65 = arith.constant 0.000000e+00 : f32
    %183 = vector.broadcast %cst_65 : f32 to vector<16x16xf32>
    %184 = vector.shape_cast %182 : vector<16x1xi1> to vector<16x1xi1>
    %185 = vector.broadcast %184 : vector<16x1xi1> to vector<16x16xi1>
    %186 = arith.select %185, %180, %183 : vector<16x16xi1>, vector<16x16xf32>
    %187 = vector.extract_strided_slice %95 {offsets = [1, 0], sizes = [15, 16], strides = [1, 1]} : vector<16x16xf32> to vector<15x16xf32>
    %cst_66 = arith.constant 0.000000e+00 : f32
    %188 = vector.broadcast %cst_66 : f32 to vector<1x16xf32>
    %189 = tpu.concatenate %187, %188 in 0 : vector<15x16xf32>, vector<1x16xf32> -> vector<16x16xf32>
    %c3_i32_67 = arith.constant 3 : i32
    %190 = vector.broadcast %c3_i32_67 : i32 to vector<16x1xi32>
    %191 = arith.cmpi slt, %16, %190 : vector<16x1xi32>
    %cst_68 = arith.constant 0.000000e+00 : f32
    %192 = vector.broadcast %cst_68 : f32 to vector<16x16xf32>
    %193 = vector.shape_cast %191 : vector<16x1xi1> to vector<16x1xi1>
    %194 = vector.broadcast %193 : vector<16x1xi1> to vector<16x16xi1>
    %195 = arith.select %194, %189, %192 : vector<16x16xi1>, vector<16x16xf32>
    %196 = vector.extract_strided_slice %95 {offsets = [3, 0], sizes = [13, 16], strides = [1, 1]} : vector<16x16xf32> to vector<13x16xf32>
    %cst_69 = arith.constant 0.000000e+00 : f32
    %197 = vector.broadcast %cst_69 : f32 to vector<3x16xf32>
    %198 = tpu.concatenate %196, %197 in 0 : vector<13x16xf32>, vector<3x16xf32> -> vector<16x16xf32>
    %c0_i32_70 = arith.constant 0 : i32
    %199 = vector.broadcast %c0_i32_70 : i32 to vector<16x1xi32>
    %200 = arith.cmpi sgt, %16, %199 : vector<16x1xi32>
    %cst_71 = arith.constant 0.000000e+00 : f32
    %201 = vector.broadcast %cst_71 : f32 to vector<16x16xf32>
    %202 = vector.shape_cast %200 : vector<16x1xi1> to vector<16x1xi1>
    %203 = vector.broadcast %202 : vector<16x1xi1> to vector<16x16xi1>
    %204 = arith.select %203, %198, %201 : vector<16x16xi1>, vector<16x16xf32>
    %205 = vector.extract_strided_slice %95 {offsets = [4, 0], sizes = [12, 16], strides = [1, 1]} : vector<16x16xf32> to vector<12x16xf32>
    %cst_72 = arith.constant 0.000000e+00 : f32
    %206 = vector.broadcast %cst_72 : f32 to vector<4x16xf32>
    %207 = tpu.concatenate %205, %206 in 0 : vector<12x16xf32>, vector<4x16xf32> -> vector<16x16xf32>
    %208 = vector.extract_strided_slice %95 {offsets = [5, 0], sizes = [11, 16], strides = [1, 1]} : vector<16x16xf32> to vector<11x16xf32>
    %cst_73 = arith.constant 0.000000e+00 : f32
    %209 = vector.broadcast %cst_73 : f32 to vector<5x16xf32>
    %210 = tpu.concatenate %208, %209 in 0 : vector<11x16xf32>, vector<5x16xf32> -> vector<16x16xf32>
    %c3_i32_74 = arith.constant 3 : i32
    %211 = vector.broadcast %c3_i32_74 : i32 to vector<16x1xi32>
    %212 = arith.cmpi slt, %16, %211 : vector<16x1xi32>
    %cst_75 = arith.constant 0.000000e+00 : f32
    %213 = vector.broadcast %cst_75 : f32 to vector<16x16xf32>
    %214 = vector.shape_cast %212 : vector<16x1xi1> to vector<16x1xi1>
    %215 = vector.broadcast %214 : vector<16x1xi1> to vector<16x16xi1>
    %216 = arith.select %215, %210, %213 : vector<16x16xi1>, vector<16x16xf32>
    %217 = tpu.concatenate %165, %168, %177, %186, %95, %195, %204, %207, %216 in 1 : vector<16x16xf32>, vector<16x16xf32>, vector<16x16xf32>, vector<16x16xf32>, vector<16x16xf32>, vector<16x16xf32>, vector<16x16xf32>, vector<16x16xf32>, vector<16x16xf32> -> vector<16x144xf32>
    %c0_76 = arith.constant 0 : index
    %c0_77 = arith.constant 0 : index
    %218 = vector.load %arg6[%c0_76, %c0_77] : memref<144x16xf32, #tpu.memory_space<vmem>>, vector<144x16xf32>
    %cst_78 = arith.constant dense<0.000000e+00> : vector<16x16xf32>
    %219 = tpu.matmul %156, %218, %cst_78 {dimension_numbers = #tpu.dot_dimension_numbers<[1], [0], [0], [1], [0, 0, 1, 1], [], []>} : vector<16x144xf32>, vector<144x16xf32>, vector<16x16xf32> -> vector<16x16xf32>
    %c0_79 = arith.constant 0 : index
    %c0_80 = arith.constant 0 : index
    %220 = vector.load %arg7[%c0_79, %c0_80] : memref<144x16xf32, #tpu.memory_space<vmem>>, vector<144x16xf32>
    %cst_81 = arith.constant dense<0.000000e+00> : vector<16x16xf32>
    %221 = tpu.matmul %217, %220, %cst_81 {dimension_numbers = #tpu.dot_dimension_numbers<[1], [0], [0], [1], [0, 0, 1, 1], [], []>} : vector<16x144xf32>, vector<144x16xf32>, vector<16x16xf32> -> vector<16x16xf32>
    %222 = arith.addf %219, %221 : vector<16x16xf32>
    %c0_82 = arith.constant 0 : index
    %c0_83 = arith.constant 0 : index
    %223 = vector.load %arg8[%c0_82, %c0_83] : memref<1x16xf32, #tpu.memory_space<vmem>>, vector<1x16xf32>
    %224 = vector.broadcast %223 : vector<1x16xf32> to vector<16x16xf32>
    %225 = arith.addf %222, %224 : vector<16x16xf32>
    %cst_84 = arith.constant 0.000000e+00 : f32
    %226 = vector.broadcast %cst_84 : f32 to vector<16x16xf32>
    %227 = arith.cmpf ogt, %225, %226 : vector<16x16xf32>
    %cst_85 = arith.constant 1.000000e-01 : f32
    %228 = vector.broadcast %cst_85 : f32 to vector<16x16xf32>
    %229 = arith.mulf %228, %225 : vector<16x16xf32>
    %230 = arith.select %227, %225, %229 : vector<16x16xi1>, vector<16x16xf32>
    %231 = tpu.transpose %230, [1, 0] : vector<16x16xf32> -> vector<16x16xf32>
    %c0_86 = arith.constant 0 : index
    %c0_87 = arith.constant 0 : index
    %c0_88 = arith.constant 0 : index
    %232 = vector.load %arg9[%c0_86, %c0_87, %c0_88] : memref<1x16x16xf32, #tpu.memory_space<vmem>>, vector<1x16x16xf32>
    %233 = vector.shape_cast %232 : vector<1x16x16xf32> to vector<16x16xf32>
    %234 = vector.shape_cast %231 : vector<16x16xf32> to vector<1x16x16xf32>
    tpu.vector_store %arg9[%c0_86, %c0_87, %c0_88], %234 {strides = array<i32>} : memref<1x16x16xf32, #tpu.memory_space<vmem>>, vector<1x16x16xf32>,
    return
  }
  func.func @transform_0(%arg0: i32) -> (i32, i32, i32) {
    %c0_i32 = arith.constant 0 : i32
    %c0_i32_0 = arith.constant 0 : i32
    %c0_i32_1 = arith.constant 0 : i32
    return %arg0, %c0_i32, %c0_i32_0 : i32, i32, i32
  }
  func.func @transform_1(%arg0: i32) -> (i32, i32, i32) {
    %c0_i32 = arith.constant 0 : i32
    %c0_i32_0 = arith.constant 0 : i32
    %c0_i32_1 = arith.constant 0 : i32
    return %arg0, %c0_i32, %c0_i32_0 : i32, i32, i32
  }
  func.func @transform_2(%arg0: i32) -> (i32, i32) {
    %c0_i32 = arith.constant 0 : i32
    %c0_i32_0 = arith.constant 0 : i32
    %c0_i32_1 = arith.constant 0 : i32
    return %c0_i32, %c0_i32_0 : i32, i32
  }
  func.func @transform_3(%arg0: i32) -> (i32, i32) {
    %c0_i32 = arith.constant 0 : i32
    %c0_i32_0 = arith.constant 0 : i32
    %c0_i32_1 = arith.constant 0 : i32
    return %c0_i32, %c0_i32_0 : i32, i32
  }
  func.func @transform_4(%arg0: i32) -> (i32, i32) {
    %c0_i32 = arith.constant 0 : i32
    %c0_i32_0 = arith.constant 0 : i32
    %c0_i32_1 = arith.constant 0 : i32
    return %c0_i32, %c0_i32_0 : i32, i32
  }
  func.func @transform_5(%arg0: i32) -> (i32, i32) {
    %c0_i32 = arith.constant 0 : i32
    %c0_i32_0 = arith.constant 0 : i32
    %c0_i32_1 = arith.constant 0 : i32
    return %c0_i32, %c0_i32_0 : i32, i32
  }
  func.func @transform_6(%arg0: i32) -> (i32, i32) {
    %c0_i32 = arith.constant 0 : i32
    %c0_i32_0 = arith.constant 0 : i32
    %c0_i32_1 = arith.constant 0 : i32
    return %c0_i32, %c0_i32_0 : i32, i32
  }
  func.func @transform_7(%arg0: i32) -> (i32, i32) {
    %c0_i32 = arith.constant 0 : i32
    %c0_i32_0 = arith.constant 0 : i32
    %c0_i32_1 = arith.constant 0 : i32
    return %c0_i32, %c0_i32_0 : i32, i32
  }
  func.func @transform_8(%arg0: i32) -> (i32, i32, i32) {
    %c0_i32 = arith.constant 0 : i32
    %c0_i32_0 = arith.constant 0 : i32
    %c0_i32_1 = arith.constant 0 : i32
    return %arg0, %c0_i32, %c0_i32_0 : i32, i32, i32
  }
}

</mosaic_0001>

<llo_original>
// kernel: tpu_custom_call.1
$region0: #{tpu_custom_call.1}
  #allocation0 [shape = 'u32[]', space=smem, size = 0x4, offset = 0x4, fixed_abs, tag = 'smem constant byte address 0x4 - core index']
  #allocation1 [shape = 'u32[144,128]{1,0:T(1,128)}', space=vmem, size = 0x12000, scoped, tag = 'internal scratch']
  %s0 = inlined_call_operand.vmem [shape: f32[2,32,4], index: 0, kind: input, shape index: {}]
  %s1 = inlined_call_operand.vmem [shape: f32[2,16,16], index: 1, kind: input, shape index: {}]
  %s2 = inlined_call_operand.vmem [shape: f32[16,4], index: 2, kind: input, shape index: {}]
  %s3 = inlined_call_operand.vmem [shape: f32[288,16], index: 3, kind: input, shape index: {}]
  %s4 = inlined_call_operand.vmem [shape: f32[1,16], index: 4, kind: input, shape index: {}]
  %s5 = inlined_call_operand.vmem [shape: f32[144,16], index: 5, kind: input, shape index: {}]
  %s6 = inlined_call_operand.vmem [shape: f32[144,16], index: 6, kind: input, shape index: {}]
  %s7 = inlined_call_operand.vmem [shape: f32[1,16], index: 7, kind: input, shape index: {}]
  %s8 = inlined_call_operand.hbm [shape: f32[2,16,16], index: 8, kind: output, shape index: {}]
  %s9 = sld [smem:[#allocation0]]
  $region65: #{tpu_custom_call.1} parent=0
    _
  %s11 = ssub.s32 1, %s9
  %s12 = scalar_select 0, %s11, %s9
  $region1: #{tpu_custom_call.1} parent=0
    #allocation2 [shape = 'u8[16384]{0}', space=vmem, size = 0x4000, scoped, tag = 'output window, operand 0']
    #allocation3 [shape = 's32[2]{0}', space=sflag, size = 0x8, scoped, tag = 'scoped memory for tpu_custom_call.1']
    %13 = vsyncpa [#allocation3], 0
    %s14 = scalar_lea.sflag [#allocation3], 1
    %15 = vsyncpa %s14, 0
    loop: start=0, step=1, limit=4
    $region2: #{tpu_custom_call.1} parent=1 // loop_pre_header
      _
    $region3: #{tpu_custom_call.1} parent=1 // loop_header
      %s17 = sphi 0, %s21
      %p18 = scmp.ge.s32.totalorder %s17, 4
      %s27 = sphi 0, %s29
      %s30 = sphi 0, %s27
      %s31 = sphi 0, %s30
      %s47 = sphi 0, %s31
      %s53 = sphi 0, %s55
      %s56 = sphi 0, %s53
      %s57 = sphi 0, %s56
      %s73 = sphi 0, %s57
      %s77 = sphi 0, %s77
      %s79 = sphi 0, %s77
      %s80 = sphi 0, %s79
      %s94 = sphi 0, %s80
      %s98 = sphi 0, %s98
      %s100 = sphi 0, %s98
      %s101 = sphi 0, %s100
      %s115 = sphi 0, %s101
      %s119 = sphi 0, %s119
      %s121 = sphi 0, %s119
      %s122 = sphi 0, %s121
      %s136 = sphi 0, %s122
      %s140 = sphi 0, %s140
      %s142 = sphi 0, %s140
      %s143 = sphi 0, %s142
      %s157 = sphi 0, %s143
      %s161 = sphi 0, %s161
      %s163 = sphi 0, %s161
      %s164 = sphi 0, %s163
      %s178 = sphi 0, %s164
      %s182 = sphi 0, %s182
      %s184 = sphi 0, %s182
      %s185 = sphi 0, %s184
      %s199 = sphi 0, %s185
      %s205 = sphi 0, %s207
      %s208 = sphi 0, %s205
      %s209 = sphi 0, %s208
      %s225 = sphi 0, %s209
    $region4: #{tpu_custom_call.1} parent=1 // loop_header_branch
      %20 = sbr.rel (%p18) target = $region8
    $region5: #{tpu_custom_call.1} parent=1 // loop_body
      %s22 = ssub.s32 %s17, 1
      %s23 = ssub.s32 %s17, 2
      %s24 = sadd.s32 %s17, 1
      %s25 = ssub.s32 %s17, %s24
      %p26 = scmp.eq.s32.totalorder %s25, 0
      %s28 = sadd.s32 %s27, 1
      %s29 = scalar_select %p26, %s27, %s28
      %p32 = pneg %p26
      %p33 = scmp.eq.s32.totalorder %s17, 1
      %p34 = por %p32, %p33
      %p35 = scmp.ne.s32.totalorder %s27, %s30
      %p36 = scmp.eq.s32.totalorder %s17, 0
      %p37 = por %p35, %p36
      %p38 = scmp.ne.s32.totalorder %s27, %s30
      %p39 = scmp.eq.s32.totalorder %s22, 1
      %p40 = por %p38, %p39
      %p41 = scmp.ne.s32.totalorder %s30, %s31
      %p42 = scmp.eq.s32.totalorder %s22, 0
      %p43 = por %p41, %p42
      %p44 = scmp.ne.s32.totalorder %s30, %s31
      %p45 = scmp.eq.s32.totalorder %s23, 1
      %p46 = por %p44, %p45
      %p48 = scmp.ne.s32.totalorder %s31, %s47
      %p49 = scmp.eq.s32.totalorder %s23, 0
      %p50 = por %p48, %p49
      %s51 = ssub.s32 %s17, %s24
      %p52 = scmp.eq.s32.totalorder %s51, 0
      %s54 = sadd.s32 %s53, 1
      %s55 = scalar_select %p52, %s53, %s54
      %p58 = pneg %p52
      %p59 = scmp.eq.s32.totalorder %s17, 1
      %p60 = por %p58, %p59
      %p61 = scmp.ne.s32.totalorder %s53, %s56
      %p62 = scmp.eq.s32.totalorder %s17, 0
      %p63 = por %p61, %p62
      %p64 = scmp.ne.s32.totalorder %s53, %s56
      %p65 = scmp.eq.s32.totalorder %s22, 1
      %p66 = por %p64, %p65
      %p67 = scmp.ne.s32.totalorder %s56, %s57
      %p68 = scmp.eq.s32.totalorder %s22, 0
      %p69 = por %p67, %p68
      %p70 = scmp.ne.s32.totalorder %s56, %s57
      %p71 = scmp.eq.s32.totalorder %s23, 1
      %p72 = por %p70, %p71
      %p74 = scmp.ne.s32.totalorder %s57, %s73
      %p75 = scmp.eq.s32.totalorder %s23, 0
      %p76 = por %p74, %p75
      %s78 = sadd.s32 %s77, 1
      %p81 = scmp.eq.s32.totalorder %s17, 1
      %p82 = scmp.ne.s32.totalorder %s77, %s79
      %p83 = scmp.eq.s32.totalorder %s17, 0
      %p84 = por %p82, %p83
      %p85 = scmp.ne.s32.totalorder %s77, %s79
      %p86 = scmp.eq.s32.totalorder %s22, 1
      %p87 = por %p85, %p86
      %p88 = scmp.ne.s32.totalorder %s79, %s80
      %p89 = scmp.eq.s32.totalorder %s22, 0
      %p90 = por %p88, %p89
      %p91 = scmp.ne.s32.totalorder %s79, %s80
      %p92 = scmp.eq.s32.totalorder %s23, 1
      %p93 = por %p91, %p92
      %p95 = scmp.ne.s32.totalorder %s80, %s94
      %p96 = scmp.eq.s32.totalorder %s23, 0
      %p97 = por %p95, %p96
      %s99 = sadd.s32 %s98, 1
      %p102 = scmp.eq.s32.totalorder %s17, 1
      %p103 = scmp.ne.s32.totalorder %s98, %s100
      %p104 = scmp.eq.s32.totalorder %s17, 0
      %p105 = por %p103, %p104
      %p106 = scmp.ne.s32.totalorder %s98, %s100
      %p107 = scmp.eq.s32.totalorder %s22, 1
      %p108 = por %p106, %p107
      %p109 = scmp.ne.s32.totalorder %s100, %s101
      %p110 = scmp.eq.s32.totalorder %s22, 0
      %p111 = por %p109, %p110
      %p112 = scmp.ne.s32.totalorder %s100, %s101
      %p113 = scmp.eq.s32.totalorder %s23, 1
      %p114 = por %p112, %p113
      %p116 = scmp.ne.s32.totalorder %s101, %s115
      %p117 = scmp.eq.s32.totalorder %s23, 0
      %p118 = por %p116, %p117
      %s120 = sadd.s32 %s119, 1
      %p123 = scmp.eq.s32.totalorder %s17, 1
      %p124 = scmp.ne.s32.totalorder %s119, %s121
      %p125 = scmp.eq.s32.totalorder %s17, 0
      %p126 = por %p124, %p125
      %p127 = scmp.ne.s32.totalorder %s119, %s121
      %p128 = scmp.eq.s32.totalorder %s22, 1
      %p129 = por %p127, %p128
      %p130 = scmp.ne.s32.totalorder %s121, %s122
      %p131 = scmp.eq.s32.totalorder %s22, 0
      %p132 = por %p130, %p131
      %p133 = scmp.ne.s32.totalorder %s121, %s122
      %p134 = scmp.eq.s32.totalorder %s23, 1
      %p135 = por %p133, %p134
      %p137 = scmp.ne.s32.totalorder %s122, %s136
      %p138 = scmp.eq.s32.totalorder %s23, 0
      %p139 = por %p137, %p138
      %s141 = sadd.s32 %s140, 1
      %p144 = scmp.eq.s32.totalorder %s17, 1
      %p145 = scmp.ne.s32.totalorder %s140, %s142
      %p146 = scmp.eq.s32.totalorder %s17, 0
      %p147 = por %p145, %p146
      %p148 = scmp.ne.s32.totalorder %s140, %s142
      %p149 = scmp.eq.s32.totalorder %s22, 1
      %p150 = por %p148, %p149
      %p151 = scmp.ne.s32.totalorder %s142, %s143
      %p152 = scmp.eq.s32.totalorder %s22, 0
      %p153 = por %p151, %p152
      %p154 = scmp.ne.s32.totalorder %s142, %s143
      %p155 = scmp.eq.s32.totalorder %s23, 1
      %p156 = por %p154, %p155
      %p158 = scmp.ne.s32.totalorder %s143, %s157
      %p159 = scmp.eq.s32.totalorder %s23, 0
      %p160 = por %p158, %p159
      %s162 = sadd.s32 %s161, 1
      %p165 = scmp.eq.s32.totalorder %s17, 1
      %p166 = scmp.ne.s32.totalorder %s161, %s163
      %p167 = scmp.eq.s32.totalorder %s17, 0
      %p168 = por %p166, %p167
      %p169 = scmp.ne.s32.totalorder %s161, %s163
      %p170 = scmp.eq.s32.totalorder %s22, 1
      %p171 = por %p169, %p170
      %p172 = scmp.ne.s32.totalorder %s163, %s164
      %p173 = scmp.eq.s32.totalorder %s22, 0
      %p174 = por %p172, %p173
      %p175 = scmp.ne.s32.totalorder %s163, %s164
      %p176 = scmp.eq.s32.totalorder %s23, 1
      %p177 = por %p175, %p176
      %p179 = scmp.ne.s32.totalorder %s164, %s178
      %p180 = scmp.eq.s32.totalorder %s23, 0
      %p181 = por %p179, %p180
      %s183 = sadd.s32 %s182, 1
      %p186 = scmp.eq.s32.totalorder %s17, 1
      %p187 = scmp.ne.s32.totalorder %s182, %s184
      %p188 = scmp.eq.s32.totalorder %s17, 0
      %p189 = por %p187, %p188
      %p190 = scmp.ne.s32.totalorder %s182, %s184
      %p191 = scmp.eq.s32.totalorder %s22, 1
      %p192 = por %p190, %p191
      %p193 = scmp.ne.s32.totalorder %s184, %s185
      %p194 = scmp.eq.s32.totalorder %s22, 0
      %p195 = por %p193, %p194
      %p196 = scmp.ne.s32.totalorder %s184, %s185
      %p197 = scmp.eq.s32.totalorder %s23, 1
      %p198 = por %p196, %p197
      %p200 = scmp.ne.s32.totalorder %s185, %s199
      %p201 = scmp.eq.s32.totalorder %s23, 0
      %p202 = por %p200, %p201
      %s203 = ssub.s32 %s17, %s24
      %p204 = scmp.eq.s32.totalorder %s203, 0
      %s206 = sadd.s32 %s205, 1
      %s207 = scalar_select %p204, %s205, %s206
      %p210 = pneg %p204
      %p211 = scmp.eq.s32.totalorder %s17, 1
      %p212 = por %p210, %p211
      %p213 = scmp.ne.s32.totalorder %s205, %s208
      %p214 = scmp.eq.s32.totalorder %s17, 0
      %p215 = por %p213, %p214
      %p216 = scmp.ne.s32.totalorder %s205, %s208
      %p217 = scmp.eq.s32.totalorder %s22, 1
      %p218 = por %p216, %p217
      %p219 = scmp.ne.s32.totalorder %s208, %s209
      %p220 = scmp.eq.s32.totalorder %s22, 0
      %p221 = por %p219, %p220
      %p222 = scmp.ne.s32.totalorder %s208, %s209
      %p223 = scmp.eq.s32.totalorder %s23, 1
      %p224 = por %p222, %p223
      %p226 = scmp.ne.s32.totalorder %s209, %s225
      %p227 = scmp.eq.s32.totalorder %s23, 0
      %p228 = por %p226, %p227
      %p229 = scmp.le.s32.totalorder 1, %s17
      %p230 = scmp.lt.s32.totalorder %s17, 3
      %p231 = pnand %p229, %p230
      %p232 = pneg %p231
      // Predicated region
      $region9: #{tpu_custom_call.1} parent=5 // pred_check
        _
      $region10: #{tpu_custom_call.1} parent=5 // pred_check_branch
        %234 = sbr.rel (%p231) target = $region12
      $region11: #{tpu_custom_call.1} parent=5 // pred_region
        %s235 = ssub.s32 %s17, 1
        // Predicated region
        $region13: #{tpu_custom_call.1} parent=11 // pred_check
          %p236 = pneg %p90
        $region14: #{tpu_custom_call.1} parent=11 // pred_check_branch
          %238 = sbr.rel (%p236) target = $region16
        $region15: #{tpu_custom_call.1} parent=11 // pred_region
          _
        $region16: #{tpu_custom_call.1} parent=11 // pred_fallthru
          _
        // Predicated region
        $region17: #{tpu_custom_call.1} parent=11 // pred_check
          %p239 = pneg %p111
        $region18: #{tpu_custom_call.1} parent=11 // pred_check_branch
          %241 = sbr.rel (%p239) target = $region20
        $region19: #{tpu_custom_call.1} parent=11 // pred_region
          _
        $region20: #{tpu_custom_call.1} parent=11 // pred_fallthru
          _
        // Predicated region
        $region21: #{tpu_custom_call.1} parent=11 // pred_check
          %p242 = pneg %p132
        $region22: #{tpu_custom_call.1} parent=11 // pred_check_branch
          %244 = sbr.rel (%p242) target = $region24
        $region23: #{tpu_custom_call.1} parent=11 // pred_region
          _
        $region24: #{tpu_custom_call.1} parent=11 // pred_fallthru
          _
        // Predicated region
        $region25: #{tpu_custom_call.1} parent=11 // pred_check
          %p245 = pneg %p153
        $region26: #{tpu_custom_call.1} parent=11 // pred_check_branch
          %247 = sbr.rel (%p245) target = $region28
        $region27: #{tpu_custom_call.1} parent=11 // pred_region
          _
        $region28: #{tpu_custom_call.1} parent=11 // pred_fallthru
          _
        // Predicated region
        $region29: #{tpu_custom_call.1} parent=11 // pred_check
          %p248 = pneg %p174
        $region30: #{tpu_custom_call.1} parent=11 // pred_check_branch
          %250 = sbr.rel (%p248) target = $region32
        $region31: #{tpu_custom_call.1} parent=11 // pred_region
          _
        $region32: #{tpu_custom_call.1} parent=11 // pred_fallthru
          _
        // Predicated region
        $region33: #{tpu_custom_call.1} parent=11 // pred_check
          %p251 = pneg %p195
        $region34: #{tpu_custom_call.1} parent=11 // pred_check_branch
          %253 = sbr.rel (%p251) target = $region36
        $region35: #{tpu_custom_call.1} parent=11 // pred_region
          _
        $region36: #{tpu_custom_call.1} parent=11 // pred_fallthru
          _
      $region12: #{tpu_custom_call.1} parent=5 // pred_fallthru
        _
      %p254 = scmp.lt.s32.totalorder %s17, 2
      // Predicated region
      $region37: #{tpu_custom_call.1} parent=5 // pred_check
        %p255 = pneg %p254
      $region38: #{tpu_custom_call.1} parent=5 // pred_check_branch
        %257 = sbr.rel (%p255) target = $region40
      $region39: #{tpu_custom_call.1} parent=5 // pred_region
        // Predicated region
        $region41: #{tpu_custom_call.1} parent=39 // pred_check
          %p258 = pneg %p37
        $region42: #{tpu_custom_call.1} parent=39 // pred_check_branch
          %260 = sbr.rel (%p258) target = $region44
        $region43: #{tpu_custom_call.1} parent=39 // pred_region
          %p261 = scmp.lt.s32.totalorder %s17, 1
          %s262 = scalar_select %p261, %s17, 1
          %s263 = smul.addr %s262, 4
          %s264 = smul.addr %s263, 8
          %s265 = scalar_lea.vmem %s0, %s264
        $region44: #{tpu_custom_call.1} parent=39 // pred_fallthru
          _
        // Predicated region
        $region45: #{tpu_custom_call.1} parent=39 // pred_check
          %p266 = pneg %p63
        $region46: #{tpu_custom_call.1} parent=39 // pred_check_branch
          %268 = sbr.rel (%p266) target = $region48
        $region47: #{tpu_custom_call.1} parent=39 // pred_region
          %p269 = scmp.lt.s32.totalorder %s17, 1
          %s270 = scalar_select %p269, %s17, 1
          %s271 = smul.addr %s270, 2
          %s272 = smul.addr %s271, 8
          %s273 = scalar_lea.vmem %s1, %s272
        $region48: #{tpu_custom_call.1} parent=39 // pred_fallthru
          _
      $region40: #{tpu_custom_call.1} parent=5 // pred_fallthru
        _
      %p274 = scmp.le.s32.totalorder 1, %s17
      %p275 = scmp.lt.s32.totalorder %s17, 3
      %p276 = pnand %p274, %p275
      %p277 = pneg %p276
      // Predicated region
      $region49: #{tpu_custom_call.1} parent=5 // pred_check
        _
      $region50: #{tpu_custom_call.1} parent=5 // pred_check_branch
        %279 = sbr.rel (%p276) target = $region52
      $region51: #{tpu_custom_call.1} parent=5 // pred_region
        %s280 = ssub.s32 %s17, 1
        %p281 = scmp.lt.s32.totalorder %s22, 1
        %s282 = scalar_select %p281, %s22, 1
        %s283 = smul.addr %s282, 4
        %s284 = smul.addr %s283, 8
        %s285 = scalar_lea.vmem %s0, %s284
        %p286 = pneg %p43
        %p287 = pneg %p40
        %p288 = scmp.lt.s32.totalorder %s22, 1
        %s289 = scalar_select %p288, %s22, 1
        %s290 = smul.addr %s289, 2
        %s291 = smul.addr %s290, 8
        %s292 = scalar_lea.vmem %s1, %s291
        %p293 = pneg %p69
        %p294 = pneg %p66
        %p295 = pneg %p90
        %p296 = pneg %p87
        %p297 = pneg %p111
        %p298 = pneg %p108
        %p299 = pneg %p132
        %p300 = pneg %p129
        %p301 = pneg %p153
        %p302 = pneg %p150
        %p303 = pneg %p174
        %p304 = pneg %p171
        %p305 = pneg %p195
        %p306 = pneg %p192
        %p307 = pneg %p221
        %p308 = pneg %p218
        %s309 = sand.u32 %s208, 1
        %s310 = scalar_lea.sflag [#allocation3], %s309
        %s311 = sand.u32 %s208, 1
        %s312 = smul.addr %s311, 16
        %s313 = scalar_lea.vmem [#allocation2], %s312
        %p314 = scmp.lt.s32.totalorder %s22, 1
        %s315 = scalar_select %p314, %s22, 1
        %s316 = smul.addr %s315, 4
        %s317 = smul.addr %s316, 8
        %s318 = scalar_lea.vmem %s0, %s317
        %p319 = scmp.lt.s32.totalorder %s22, 1
        %s320 = scalar_select %p319, %s22, 1
        %s321 = smul.addr %s320, 2
        %s322 = smul.addr %s321, 8
        %s323 = scalar_lea.vmem %s1, %s322
        %v324 = vlaneseq
        %v325 = vshrl.u32 %v324, 7
        %v326 = vadd.s32 %v325, 8
        %vm327 = vcmp.lt.s32.totalorder %v325, 0
        %v328 = vsub.s32 0, %v325
        %v329 = vsel %vm327, %v328, %v325
        %v330 = vshrl.u32 %v329, 2
        %v331 = vand.u32 %v329, 3
        %v332 = vsub.s32 0, %v331
        %v333 = vsel %vm327, %v332, %v331
        %vm334 = vcmp.lt.s32.totalorder %v326, 0
        %v335 = vsub.s32 0, %v326
        %v336 = vsel %vm334, %v335, %v326
        %v337 = vshrl.u32 %v336, 2
        %v338 = vand.u32 %v336, 3
        %v339 = vsub.s32 0, %v338
        %v340 = vsel %vm334, %v339, %v338
        %vm341 = vcmp.ne.s32.totalorder %v333, 0
        %vm342 = vcmp.ne.s32.totalorder %v340, 0
        %vm343 = vcmp.lt.s32.totalorder %v333, 0
        %vm344 = vcmp.lt.s32.totalorder %v340, 0
        %vm345 = vmand %vm343, %vm341
        %vm346 = vmand %vm344, %vm342
        %v347 = vadd.s32 %v333, 4
        %v348 = vadd.s32 %v340, 4
        %v349 = vsel %vm345, %v347, %v333
        %v350 = vsel %vm346, %v348, %v340
        %v351 = vld [vmem:[%s2] sm:$0xff]
        %v352 = vld [vmem:[%s2 + $0x8] sm:$0xff]
        %v353 = vld [vmem:[%s318] sm:$0xff]
        %v354 = vld [vmem:[%s318 + $0x8] sm:$0xff]
        %v355 = vld [vmem:[%s318 + $0x10] sm:$0xff]
        %v356 = vld [vmem:[%s318 + $0x18] sm:$0xff]
        %vm357 = vcmask 31744
        %v359 = vsel %vm357, %v351, 0
        %v362 = vsel %vm357, %v352, 0
        %v365 = vsel %vm357, %v353, 0
        %v368 = vsel %vm357, %v354, 0
        %v371 = vsel %vm357, %v355, 0
        %v374 = vsel %vm357, %v356, 0
        %376 = vmatprep.subr.mxu0 0.0
        %377 = vmatpush1.xpose.msra.mxu0 0.0
        %378 = vmatprep.subr.mxu0 0.0
        %379 = vmatpush1.xpose.msra.mxu0 0.0
        %380 = vmatprep.subr.mxu0 0.0
        %381 = vmatpush1.xpose.msra.mxu0 0.0
        %382 = vmatprep.subr.mxu0 0.0
        %383 = vmatpush1.xpose.msra.mxu0 0.0
        %384 = vmatprep.subr.mxu0 0.0
        %385 = vmatpush1.xpose.msra.mxu0 0.0
        %386 = vmatprep.subr.mxu0 0.0
        %387 = vmatpush1.xpose.msra.mxu0 0.0
        %388 = vmatprep.subr.mxu0 0.0
        %389 = vmatpush1.xpose.msra.mxu0 0.0
        %390 = vmatprep.subr.mxu0 0.0
        %391 = vmatpush1.xpose.msra.mxu0 0.0
        %392 = vmatprep.subr.mxu0 0.0
        %393 = vmatpush1.xpose.msra.mxu0 0.0
        %394 = vmatprep.subr.mxu0 0.0
        %395 = vmatpush1.xpose.msra.mxu0 0.0
        %396 = vmatprep.subr.mxu0 0.0
        %397 = vmatpush1.xpose.msra.mxu0 0.0
        %398 = vmatprep.subr.mxu0 0.0
        %399 = vmatpush1.xpose.msra.mxu0 0.0
        %400 = vmatprep.subr.mxu0 0.0
        %401 = vmatpush1.xpose.msra.mxu0 %v374
        %402 = vmatprep.subr.mxu0 0.0
        %403 = vmatpush1.xpose.msra.mxu0 %v371
        %404 = vmatprep.subr.mxu0 0.0
        %405 = vmatpush1.xpose.msra.mxu0 %v368
        %406 = vmatprep.subr.mxu0 0.0
        %407 = vmatpush1.xpose.msra.mxu0 %v365
        %408 = vmatprep.subr.mxu0 0.0
        %409 = vmatpush2.xpose.msra.mxu0 0.0
        %410 = vmatprep.subr.mxu0 0.0
        %411 = vmatpush2.xpose.msra.mxu0 0.0
        %412 = vmatprep.subr.mxu0 0.0
        %413 = vmatpush2.xpose.msra.mxu0 0.0
        %414 = vmatprep.subr.mxu0 0.0
        %415 = vmatpush2.xpose.msra.mxu0 0.0
        %416 = vmatprep.subr.mxu0 0.0
        %417 = vmatpush2.xpose.msra.mxu0 0.0
        %418 = vmatprep.subr.mxu0 0.0
        %419 = vmatpush2.xpose.msra.mxu0 0.0
        %420 = vmatprep.subr.mxu0 0.0
        %421 = vmatpush2.xpose.msra.mxu0 0.0
        %422 = vmatprep.subr.mxu0 0.0
        %423 = vmatpush2.xpose.msra.mxu0 0.0
        %424 = vmatprep.subr.mxu0 0.0
        %425 = vmatpush2.xpose.msra.mxu0 0.0
        %426 = vmatprep.subr.mxu0 0.0
        %427 = vmatpush2.xpose.msra.mxu0 0.0
        %428 = vmatprep.subr.mxu0 0.0
        %429 = vmatpush2.xpose.msra.mxu0 0.0
        %430 = vmatprep.subr.mxu0 0.0
        %431 = vmatpush2.xpose.msra.mxu0 0.0
        %432 = vmatprep.subr.mxu0 0.0
        %433 = vmatpush2.xpose.msra.mxu0 0.0
        %434 = vmatprep.subr.mxu0 0.0
        %435 = vmatpush2.xpose.msra.mxu0 0.0
        %436 = vmatprep.subr.mxu0 0.0
        %437 = vmatpush2.xpose.msra.mxu0 0.0
        %438 = vmatprep.subr.mxu0 0.0
        %439 = vmatpush2.xpose.msra.mxu0 0.0
        %440 = vmatprep.mubr.f32.mxu0 0.0
        %441 = vmatmul.mubr.f32.gmra.mxu0 %v359
        %v442 = vpop.f32.mrf.mxu0
        %v443 = vadd.f32 0.0, %v442
        %v444 = vpop.f32.mrf.mxu0
        %445 = vmatprep.mubr.f32.mxu0 0.0
        %446 = vmatmul.mubr.f32.gmra.mxu0 %v362
        %v447 = vpop.f32.mrf.mxu0
        %v448 = vadd.f32 0.0, %v447
        %v449 = vpop.f32.mrf.mxu0
        %450 = vdwg.mxu0
        %vm453 = vcmask 1044480
        %v454 = vrot.slane %v443, 3
        %v455 = vrot.slane %v448, 3
        %v456 = vsel %vm453, %v454, %v455
        %v459 = vsel %vm453, 0.0, %v454
        %vm460 = vcmp.gt.s32.totalorder %v349, 0
        %vm461 = vcmp.gt.s32.totalorder %v350, 0
        %v462 = vsel %vm460, 1, 0
        %v463 = vsel %vm461, 1, 0
        %vm464 = vcmp.eq.s32.totalorder %v462, 1
        %vm465 = vcmp.eq.s32.totalorder %v463, 1
        %v466 = vsel %vm464, %v459, 0.0
        %v467 = vsel %vm465, %v456, 0.0
        %vm468 = vcmask 1043456
        %v469 = vrot.slane %v443, 4
        %v470 = vrot.slane %v448, 4
        %v471 = vsel %vm468, %v469, %v470
        %v473 = vsel %vm468, 0.0, %v469
        %vm474 = vcmask 1042432
        %v475 = vrot.slane %v443, 5
        %v476 = vrot.slane %v448, 5
        %v477 = vsel %vm474, %v475, %v476
        %v480 = vsel %vm474, 0.0, %v475
        %vm481 = vcmp.lt.s32.totalorder %v349, 3
        %vm482 = vcmp.lt.s32.totalorder %v350, 3
        %v483 = vsel %vm481, 1, 0
        %v484 = vsel %vm482, 1, 0
        %vm485 = vcmp.eq.s32.totalorder %v483, 1
        %vm486 = vcmp.eq.s32.totalorder %v484, 1
        %v487 = vsel %vm485, %v480, 0.0
        %v488 = vsel %vm486, %v477, 0.0
        %vm489 = vcmask 1040384
        %v490 = vrot.slane %v443, 7
        %v491 = vrot.slane %v448, 7
        %v492 = vsel %vm489, %v490, %v491
        %v495 = vsel %vm489, 0.0, %v490
        %v496 = vsel %vm464, %v495, 0.0
        %v497 = vsel %vm465, %v492, 0.0
        %vm498 = vcmask 1046528
        %v499 = vrot.slane %v443, 1
        %v500 = vrot.slane %v448, 1
        %v501 = vsel %vm498, %v499, %v500
        %v504 = vsel %vm498, %v500, 0.0
        %v505 = vsel %vm485, %v501, 0.0
        %v506 = vsel %vm486, %v504, 0.0
        %v508 = vsel %vm453, %v455, 0.0
        %v509 = vsel %vm464, %v456, 0.0
        %v510 = vsel %vm465, %v508, 0.0
        %v512 = vsel %vm468, %v470, 0.0
        %v514 = vsel %vm474, %v476, 0.0
        %v515 = vsel %vm485, %v477, 0.0
        %v516 = vsel %vm486, %v514, 0.0
        %518 = vrot.lane.b32.xlu0 %v473, 32
        %v519 = vpop.permute.xlu0 %518
        %520 = vrot.lane.b32.xlu0 %v471, 32
        %v521 = vpop.permute.xlu0 %520
        %526 = vrot.lane.b32.xlu0 %v487, 64
        %v527 = vpop.permute.xlu0 %526
        %528 = vrot.lane.b32.xlu0 %v488, 64
        %v529 = vpop.permute.xlu0 %528
        %534 = vrot.lane.b32.xlu0 %v496, 96
        %v535 = vpop.permute.xlu0 %534
        %536 = vrot.lane.b32.xlu0 %v497, 96
        %v537 = vpop.permute.xlu0 %536
        %542 = vrot.lane.b32.xlu0 %v505, 32
        %v543 = vpop.permute.xlu0 %542
        %544 = vrot.lane.b32.xlu0 %v506, 32
        %v545 = vpop.permute.xlu0 %544
        %550 = vrot.lane.b32.xlu0 %v509, 64
        %v551 = vpop.permute.xlu0 %550
        %552 = vrot.lane.b32.xlu0 %v510, 64
        %v553 = vpop.permute.xlu0 %552
        %557 = vrot.lane.b32.xlu0 %v471, 96
        %v558 = vpop.permute.xlu0 %557
        %559 = vrot.lane.b32.xlu0 %v512, 96
        %v560 = vpop.permute.xlu0 %559
        %vm563 = vcmask 261120
        %v564 = vsel %vm563, %v466, %v519
        %v565 = vsel %vm563, %v467, %v521
        %vm566 = vcmask 523264
        %v567 = vsel %vm566, %v564, %v527
        %v568 = vsel %vm566, %v565, %v529
        %vm569 = vcmask 785408
        %v570 = vsel %vm569, %v567, %v535
        %v571 = vsel %vm569, %v568, %v537
        %v572 = vsel %vm563, %v443, %v543
        %v573 = vsel %vm563, %v448, %v545
        %v574 = vsel %vm566, %v572, %v551
        %v575 = vsel %vm566, %v573, %v553
        %v576 = vsel %vm569, %v574, %v558
        %v577 = vsel %vm569, %v575, %v560
        %v578 = vld [vmem:[%s3] sm:$0xff]
        %v579 = vld [vmem:[%s3 + $0x8] sm:$0xff]
        %v580 = vld [vmem:[%s3 + $0x10] sm:$0xff]
        %v581 = vld [vmem:[%s3 + $0x18] sm:$0xff]
        %v582 = vld [vmem:[%s3 + $0x20] sm:$0xff]
        %v583 = vld [vmem:[%s3 + $0x28] sm:$0xff]
        %v584 = vld [vmem:[%s3 + $0x30] sm:$0xff]
        %v585 = vld [vmem:[%s3 + $0x38] sm:$0xff]
        %v586 = vld [vmem:[%s3 + $0x40] sm:$0xff]
        %v587 = vld [vmem:[%s3 + $0x48] sm:$0xff]
        %v588 = vld [vmem:[%s3 + $0x50] sm:$0xff]
        %v589 = vld [vmem:[%s3 + $0x58] sm:$0xff]
        %v590 = vld [vmem:[%s3 + $0x60] sm:$0xff]
        %v591 = vld [vmem:[%s3 + $0x68] sm:$0xff]
        %v592 = vld [vmem:[%s3 + $0x70] sm:$0xff]
        %v593 = vld [vmem:[%s3 + $0x78] sm:$0xff]
        %v594 = vld [vmem:[%s3 + $0x80] sm:$0xff]
        %v595 = vld [vmem:[%s3 + $0x88] sm:$0xff]
        %v596 = vld [vmem:[%s3 + $0x90] sm:$0xff]
        %v597 = vld [vmem:[%s3 + $0x98] sm:$0xff]
        %v598 = vld [vmem:[%s3 + $0xa0] sm:$0xff]
        %v599 = vld [vmem:[%s3 + $0xa8] sm:$0xff]
        %v600 = vld [vmem:[%s3 + $0xb0] sm:$0xff]
        %v601 = vld [vmem:[%s3 + $0xb8] sm:$0xff]
        %v602 = vld [vmem:[%s3 + $0xc0] sm:$0xff]
        %v603 = vld [vmem:[%s3 + $0xc8] sm:$0xff]
        %v604 = vld [vmem:[%s3 + $0xd0] sm:$0xff]
        %v605 = vld [vmem:[%s3 + $0xd8] sm:$0xff]
        %v606 = vld [vmem:[%s3 + $0xe0] sm:$0xff]
        %v607 = vld [vmem:[%s3 + $0xe8] sm:$0xff]
        %v608 = vld [vmem:[%s3 + $0xf0] sm:$0xff]
        %v609 = vld [vmem:[%s3 + $0xf8] sm:$0xff]
        %v610 = vld [vmem:[%s3 + $0x100] sm:$0xff]
        %v611 = vld [vmem:[%s3 + $0x108] sm:$0xff]
        %v612 = vld [vmem:[%s3 + $0x110] sm:$0xff]
        %v613 = vld [vmem:[%s3 + $0x118] sm:$0xff]
        %v614 = vld [vmem:[%s4] sm:$0x1]
        %v616 = vlaneseq
        %v617 = vshrl.u32 %v616, 7
        %v618 = vsub.s32 0, %v617
        %v619 = vrot.slane %v614, %v618
        %v622 = vsel %vm563, %v515, 0
        %v625 = vsel %vm563, %v516, 0
        %627 = vmatprep.subr.mxu0 0.0
        %628 = vmatpush1.msra.mxu0 %v593
        %629 = vmatprep.subr.mxu0 0.0
        %630 = vmatpush1.msra.mxu0 %v592
        %631 = vmatprep.subr.mxu0 0.0
        %632 = vmatpush1.msra.mxu0 %v591
        %633 = vmatprep.subr.mxu0 0.0
        %634 = vmatpush1.msra.mxu0 %v590
        %635 = vmatprep.subr.mxu0 0.0
        %636 = vmatpush1.msra.mxu0 %v589
        %637 = vmatprep.subr.mxu0 0.0
        %638 = vmatpush1.msra.mxu0 %v588
        %639 = vmatprep.subr.mxu0 0.0
        %640 = vmatpush1.msra.mxu0 %v587
        %641 = vmatprep.subr.mxu0 0.0
        %642 = vmatpush1.msra.mxu0 %v586
        %643 = vmatprep.subr.mxu0 0.0
        %644 = vmatpush1.msra.mxu0 %v585
        %645 = vmatprep.subr.mxu0 0.0
        %646 = vmatpush1.msra.mxu0 %v584
        %647 = vmatprep.subr.mxu0 0.0
        %648 = vmatpush1.msra.mxu0 %v583
        %649 = vmatprep.subr.mxu0 0.0
        %650 = vmatpush1.msra.mxu0 %v582
        %651 = vmatprep.subr.mxu0 0.0
        %652 = vmatpush1.msra.mxu0 %v581
        %653 = vmatprep.subr.mxu0 0.0
        %654 = vmatpush1.msra.mxu0 %v580
        %655 = vmatprep.subr.mxu0 0.0
        %656 = vmatpush1.msra.mxu0 %v579
        %657 = vmatprep.subr.mxu0 0.0
        %658 = vmatpush1.msra.mxu0 %v578
        %659 = vmatprep.subr.mxu0 0.0
        %660 = vmatpush2.msra.mxu0 %v609
        %661 = vmatprep.subr.mxu0 0.0
        %662 = vmatpush2.msra.mxu0 %v608
        %663 = vmatprep.subr.mxu0 0.0
        %664 = vmatpush2.msra.mxu0 %v607
        %665 = vmatprep.subr.mxu0 0.0
        %666 = vmatpush2.msra.mxu0 %v606
        %667 = vmatprep.subr.mxu0 0.0
        %668 = vmatpush2.msra.mxu0 %v605
        %669 = vmatprep.subr.mxu0 0.0
        %670 = vmatpush2.msra.mxu0 %v604
        %671 = vmatprep.subr.mxu0 0.0
        %672 = vmatpush2.msra.mxu0 %v603
        %673 = vmatprep.subr.mxu0 0.0
        %674 = vmatpush2.msra.mxu0 %v602
        %675 = vmatprep.subr.mxu0 0.0
        %676 = vmatpush2.msra.mxu0 %v601
        %677 = vmatprep.subr.mxu0 0.0
        %678 = vmatpush2.msra.mxu0 %v600
        %679 = vmatprep.subr.mxu0 0.0
        %680 = vmatpush2.msra.mxu0 %v599
        %681 = vmatprep.subr.mxu0 0.0
        %682 = vmatpush2.msra.mxu0 %v598
        %683 = vmatprep.subr.mxu0 0.0
        %684 = vmatpush2.msra.mxu0 %v597
        %685 = vmatprep.subr.mxu0 0.0
        %686 = vmatpush2.msra.mxu0 %v596
        %687 = vmatprep.subr.mxu0 0.0
        %688 = vmatpush2.msra.mxu0 %v595
        %689 = vmatprep.subr.mxu0 0.0
        %690 = vmatpush2.msra.mxu0 %v594
        %691 = vmatprep.mubr.f32.mxu0 %v576
        %692 = vmatmul.mubr.f32.gmra.mxu0 %v570
        %v693 = vpop.f32.mrf.mxu0
        %v694 = vadd.f32 %v619, %v693
        %v695 = vpop.f32.mrf.mxu0
        %696 = vmatprep.mubr.f32.mxu0 %v577
        %697 = vmatmul.mubr.f32.gmra.mxu0 %v571
        %v698 = vpop.f32.mrf.mxu0
        %v699 = vadd.f32 %v619, %v698
        %v700 = vpop.f32.mrf.mxu0
        %701 = vdwg.mxu0
        %702 = vmatprep.subr.mxu0 0.0
        %703 = vmatpush1.msra.mxu0 0.0
        %704 = vmatprep.subr.mxu0 0.0
        %705 = vmatpush1.msra.mxu0 0.0
        %706 = vmatprep.subr.mxu0 0.0
        %707 = vmatpush1.msra.mxu0 0.0
        %708 = vmatprep.subr.mxu0 0.0
        %709 = vmatpush1.msra.mxu0 0.0
        %710 = vmatprep.subr.mxu0 0.0
        %711 = vmatpush1.msra.mxu0 0.0
        %712 = vmatprep.subr.mxu0 0.0
        %713 = vmatpush1.msra.mxu0 0.0
        %714 = vmatprep.subr.mxu0 0.0
        %715 = vmatpush1.msra.mxu0 0.0
        %716 = vmatprep.subr.mxu0 0.0
        %717 = vmatpush1.msra.mxu0 0.0
        %718 = vmatprep.subr.mxu0 0.0
        %719 = vmatpush1.msra.mxu0 0.0
        %720 = vmatprep.subr.mxu0 0.0
        %721 = vmatpush1.msra.mxu0 0.0
        %722 = vmatprep.subr.mxu0 0.0
        %723 = vmatpush1.msra.mxu0 0.0
        %724 = vmatprep.subr.mxu0 0.0
        %725 = vmatpush1.msra.mxu0 0.0
        %726 = vmatprep.subr.mxu0 0.0
        %727 = vmatpush1.msra.mxu0 %v613
        %728 = vmatprep.subr.mxu0 0.0
        %729 = vmatpush1.msra.mxu0 %v612
        %730 = vmatprep.subr.mxu0 0.0
        %731 = vmatpush1.msra.mxu0 %v611
        %732 = vmatprep.subr.mxu0 0.0
        %733 = vmatpush1.msra.mxu0 %v610
        %734 = vmatprep.subr.mxu0 0.0
        %735 = vmatpush2.msra.mxu0 0.0
        %736 = vmatprep.subr.mxu0 0.0
        %737 = vmatpush2.msra.mxu0 0.0
        %738 = vmatprep.subr.mxu0 0.0
        %739 = vmatpush2.msra.mxu0 0.0
        %740 = vmatprep.subr.mxu0 0.0
        %741 = vmatpush2.msra.mxu0 0.0
        %742 = vmatprep.subr.mxu0 0.0
        %743 = vmatpush2.msra.mxu0 0.0
        %744 = vmatprep.subr.mxu0 0.0
        %745 = vmatpush2.msra.mxu0 0.0
        %746 = vmatprep.subr.mxu0 0.0
        %747 = vmatpush2.msra.mxu0 0.0
        %748 = vmatprep.subr.mxu0 0.0
        %749 = vmatpush2.msra.mxu0 0.0
        %750 = vmatprep.subr.mxu0 0.0
        %751 = vmatpush2.msra.mxu0 0.0
        %752 = vmatprep.subr.mxu0 0.0
        %753 = vmatpush2.msra.mxu0 0.0
        %754 = vmatprep.subr.mxu0 0.0
        %755 = vmatpush2.msra.mxu0 0.0
        %756 = vmatprep.subr.mxu0 0.0
        %757 = vmatpush2.msra.mxu0 0.0
        %758 = vmatprep.subr.mxu0 0.0
        %759 = vmatpush2.msra.mxu0 0.0
        %760 = vmatprep.subr.mxu0 0.0
        %761 = vmatpush2.msra.mxu0 0.0
        %762 = vmatprep.subr.mxu0 0.0
        %763 = vmatpush2.msra.mxu0 0.0
        %764 = vmatprep.subr.mxu0 0.0
        %765 = vmatpush2.msra.mxu0 0.0
        %766 = vmatprep.mubr.f32.mxu0 0.0
        %767 = vmatmul.mubr.f32.gmra.mxu0 %v622
        %v768 = vpop.f32.mrf.mxu0
        %v769 = vadd.f32 %v694, %v768
        %v770 = vpop.f32.mrf.mxu0
        %771 = vmatprep.mubr.f32.mxu0 0.0
        %772 = vmatmul.mubr.f32.gmra.mxu0 %v625
        %v773 = vpop.f32.mrf.mxu0
        %v774 = vadd.f32 %v699, %v773
        %v775 = vpop.f32.mrf.mxu0
        %776 = vdwg.mxu0
        %vm777 = vcmp.gt.f32.partialorder %v769, 0.0
        %vm778 = vcmp.gt.f32.partialorder %v774, 0.0
        %v779 = vmul.f32 %v769, 0.1
        %v780 = vmul.f32 %v774, 0.1
        %v781 = vsel %vm777, %v769, %v779
        %v782 = vsel %vm778, %v774, %v780
        %v783 = vld [vmem:[%s323] sm:$0xff]
        %v784 = vld [vmem:[%s323 + $0x8] sm:$0xff]
        %785 = vxpose.xlu0.b32.start [1/16] %v783, 128
        %786 = vxpose.xlu0.b32.cont [2/16] %v784, 128
        %787 = vxpose.xlu0.b32.cont [3/16] 0.0, 128
        %788 = vxpose.xlu0.b32.cont [4/16] 0.0, 128
        %789 = vxpose.xlu0.b32.cont [5/16] 0.0, 128
        %790 = vxpose.xlu0.b32.cont [6/16] 0.0, 128
        %791 = vxpose.xlu0.b32.cont [7/16] 0.0, 128
        %792 = vxpose.xlu0.b32.cont [8/16] 0.0, 128
        %793 = vxpose.xlu0.b32.cont [9/16] 0.0, 128
        %794 = vxpose.xlu0.b32.cont [10/16] 0.0, 128
        %795 = vxpose.xlu0.b32.cont [11/16] 0.0, 128
        %796 = vxpose.xlu0.b32.cont [12/16] 0.0, 128
        %797 = vxpose.xlu0.b32.cont [13/16] 0.0, 128
        %798 = vxpose.xlu0.b32.cont [14/16] 0.0, 128
        %799 = vxpose.xlu0.b32.cont [15/16] 0.0, 128
        %800 = vxpose.xlu0.b32.end [16/16] 0.0, 128
        %v801 = vpop.trf.xlu0
        %v802 = vpop.trf.xlu0
        %v803 = vpop.trf.xlu0
        %v804 = vpop.trf.xlu0
        %v805 = vpop.trf.xlu0
        %v806 = vpop.trf.xlu0
        %v807 = vpop.trf.xlu0
        %v808 = vpop.trf.xlu0
        %v809 = vpop.trf.xlu0
        %v810 = vpop.trf.xlu0
        %v811 = vpop.trf.xlu0
        %v812 = vpop.trf.xlu0
        %v813 = vpop.trf.xlu0
        %v814 = vpop.trf.xlu0
        %v815 = vpop.trf.xlu0
        %v816 = vpop.trf.xlu0
        %v819 = vrot.slane %v781, 3
        %v820 = vrot.slane %v782, 3
        %v821 = vsel %vm453, %v819, %v820
        %v824 = vsel %vm453, 0.0, %v819
        %v825 = vsel %vm464, %v824, 0.0
        %v826 = vsel %vm465, %v821, 0.0
        %v827 = vrot.slane %v781, 4
        %v828 = vrot.slane %v782, 4
        %v829 = vsel %vm468, %v827, %v828
        %v831 = vsel %vm468, 0.0, %v827
        %v832 = vrot.slane %v781, 5
        %v833 = vrot.slane %v782, 5
        %v834 = vsel %vm474, %v832, %v833
        %v837 = vsel %vm474, 0.0, %v832
        %v838 = vsel %vm485, %v837, 0.0
        %v839 = vsel %vm486, %v834, 0.0
        %v840 = vrot.slane %v781, 7
        %v841 = vrot.slane %v782, 7
        %v842 = vsel %vm489, %v840, %v841
        %v845 = vsel %vm489, 0.0, %v840
        %v846 = vsel %vm464, %v845, 0.0
        %v847 = vsel %vm465, %v842, 0.0
        %v848 = vrot.slane %v781, 1
        %v849 = vrot.slane %v782, 1
        %v850 = vsel %vm498, %v848, %v849
        %v853 = vsel %vm498, %v849, 0.0
        %v854 = vsel %vm485, %v850, 0.0
        %v855 = vsel %vm486, %v853, 0.0
        %v857 = vsel %vm453, %v820, 0.0
        %v858 = vsel %vm464, %v821, 0.0
        %v859 = vsel %vm465, %v857, 0.0
        %v861 = vsel %vm468, %v828, 0.0
        %v863 = vsel %vm474, %v833, 0.0
        %v864 = vsel %vm485, %v834, 0.0
        %v865 = vsel %vm486, %v863, 0.0
        %867 = vrot.lane.b32.xlu0 %v831, 16
        %v868 = vpop.permute.xlu0 %867
        %869 = vrot.lane.b32.xlu0 %v829, 16
        %v870 = vpop.permute.xlu0 %869
        %875 = vrot.lane.b32.xlu0 %v838, 32
        %v876 = vpop.permute.xlu0 %875
        %877 = vrot.lane.b32.xlu0 %v839, 32
        %v878 = vpop.permute.xlu0 %877
        %883 = vrot.lane.b32.xlu0 %v846, 48
        %v884 = vpop.permute.xlu0 %883
        %885 = vrot.lane.b32.xlu0 %v847, 48
        %v886 = vpop.permute.xlu0 %885
        %889 = vrot.lane.b32.xlu0 %v781, 64
        %v890 = vpop.permute.xlu0 %889
        %891 = vrot.lane.b32.xlu0 %v782, 64
        %v892 = vpop.permute.xlu0 %891
        %897 = vrot.lane.b32.xlu0 %v854, 80
        %v898 = vpop.permute.xlu0 %897
        %899 = vrot.lane.b32.xlu0 %v855, 80
        %v900 = vpop.permute.xlu0 %899
        %905 = vrot.lane.b32.xlu0 %v858, 96
        %v906 = vpop.permute.xlu0 %905
        %907 = vrot.lane.b32.xlu0 %v859, 96
        %v908 = vpop.permute.xlu0 %907
        %912 = vrot.lane.b32.xlu0 %v829, 112
        %v913 = vpop.permute.xlu0 %912
        %914 = vrot.lane.b32.xlu0 %v861, 112
        %v915 = vpop.permute.xlu0 %914
        %vm918 = vcmask 130048
        %v919 = vsel %vm918, %v825, %v868
        %v920 = vsel %vm918, %v826, %v870
        %v921 = vsel %vm563, %v919, %v876
        %v922 = vsel %vm563, %v920, %v878
        %vm923 = vcmask 392192
        %v924 = vsel %vm923, %v921, %v884
        %v925 = vsel %vm923, %v922, %v886
        %v926 = vsel %vm566, %v924, %v890
        %v927 = vsel %vm566, %v925, %v892
        %vm928 = vcmask 654336
        %v929 = vsel %vm928, %v926, %v898
        %v930 = vsel %vm928, %v927, %v900
        %v931 = vsel %vm569, %v929, %v906
        %v932 = vsel %vm569, %v930, %v908
        %vm933 = vcmask 916480
        %v934 = vsel %vm933, %v931, %v913
        %v935 = vsel %vm933, %v932, %v915
        %v938 = vrot.slane %v801, 3
        %v939 = vrot.slane %v802, 3
        %v940 = vsel %vm453, %v938, %v939
        %v943 = vsel %vm453, 0.0, %v938
        %v944 = vsel %vm464, %v943, 0.0
        %v945 = vsel %vm465, %v940, 0.0
        %v946 = vrot.slane %v801, 4
        %v947 = vrot.slane %v802, 4
        %v948 = vsel %vm468, %v946, %v947
        %v950 = vsel %vm468, 0.0, %v946
        %v951 = vrot.slane %v801, 5
        %v952 = vrot.slane %v802, 5
        %v953 = vsel %vm474, %v951, %v952
        %v956 = vsel %vm474, 0.0, %v951
        %v957 = vsel %vm485, %v956, 0.0
        %v958 = vsel %vm486, %v953, 0.0
        %v959 = vrot.slane %v801, 7
        %v960 = vrot.slane %v802, 7
        %v961 = vsel %vm489, %v959, %v960
        %v964 = vsel %vm489, 0.0, %v959
        %v965 = vsel %vm464, %v964, 0.0
        %v966 = vsel %vm465, %v961, 0.0
        %v967 = vrot.slane %v801, 1
        %v968 = vrot.slane %v802, 1
        %v969 = vsel %vm498, %v967, %v968
        %v972 = vsel %vm498, %v968, 0.0
        %v973 = vsel %vm485, %v969, 0.0
        %v974 = vsel %vm486, %v972, 0.0
        %v976 = vsel %vm453, %v939, 0.0
        %v977 = vsel %vm464, %v940, 0.0
        %v978 = vsel %vm465, %v976, 0.0
        %v980 = vsel %vm468, %v947, 0.0
        %v982 = vsel %vm474, %v952, 0.0
        %v983 = vsel %vm485, %v953, 0.0
        %v984 = vsel %vm486, %v982, 0.0
        %986 = vrot.lane.b32.xlu0 %v950, 16
        %v987 = vpop.permute.xlu0 %986
        %988 = vrot.lane.b32.xlu0 %v948, 16
        %v989 = vpop.permute.xlu0 %988
        %994 = vrot.lane.b32.xlu0 %v957, 32
        %v995 = vpop.permute.xlu0 %994
        %996 = vrot.lane.b32.xlu0 %v958, 32
        %v997 = vpop.permute.xlu0 %996
        %1002 = vrot.lane.b32.xlu0 %v965, 48
        %v1003 = vpop.permute.xlu0 %1002
        %1004 = vrot.lane.b32.xlu0 %v966, 48
        %v1005 = vpop.permute.xlu0 %1004
        %1008 = vrot.lane.b32.xlu0 %v801, 64
        %v1009 = vpop.permute.xlu0 %1008
        %1010 = vrot.lane.b32.xlu0 %v802, 64
        %v1011 = vpop.permute.xlu0 %1010
        %1016 = vrot.lane.b32.xlu0 %v973, 80
        %v1017 = vpop.permute.xlu0 %1016
        %1018 = vrot.lane.b32.xlu0 %v974, 80
        %v1019 = vpop.permute.xlu0 %1018
        %1024 = vrot.lane.b32.xlu0 %v977, 96
        %v1025 = vpop.permute.xlu0 %1024
        %1026 = vrot.lane.b32.xlu0 %v978, 96
        %v1027 = vpop.permute.xlu0 %1026
        %1031 = vrot.lane.b32.xlu0 %v948, 112
        %v1032 = vpop.permute.xlu0 %1031
        %1033 = vrot.lane.b32.xlu0 %v980, 112
        %v1034 = vpop.permute.xlu0 %1033
        %v1037 = vsel %vm918, %v944, %v987
        %v1038 = vsel %vm918, %v945, %v989
        %v1039 = vsel %vm563, %v1037, %v995
        %v1040 = vsel %vm563, %v1038, %v997
        %v1041 = vsel %vm923, %v1039, %v1003
        %v1042 = vsel %vm923, %v1040, %v1005
        %v1043 = vsel %vm566, %v1041, %v1009
        %v1044 = vsel %vm566, %v1042, %v1011
        %v1045 = vsel %vm928, %v1043, %v1017
        %v1046 = vsel %vm928, %v1044, %v1019
        %v1047 = vsel %vm569, %v1045, %v1025
        %v1048 = vsel %vm569, %v1046, %v1027
        %v1049 = vsel %vm933, %v1047, %v1032
        %v1050 = vsel %vm933, %v1048, %v1034
        %v1051 = vld [vmem:[%s5] sm:$0xff]
        %v1052 = vld [vmem:[%s5 + $0x8] sm:$0xff]
        %v1053 = vld [vmem:[%s5 + $0x10] sm:$0xff]
        %v1054 = vld [vmem:[%s5 + $0x18] sm:$0xff]
        %v1055 = vld [vmem:[%s5 + $0x20] sm:$0xff]
        %v1056 = vld [vmem:[%s5 + $0x28] sm:$0xff]
        %v1057 = vld [vmem:[%s5 + $0x30] sm:$0xff]
        %v1058 = vld [vmem:[%s5 + $0x38] sm:$0xff]
        %v1059 = vld [vmem:[%s5 + $0x40] sm:$0xff]
        %v1060 = vld [vmem:[%s5 + $0x48] sm:$0xff]
        %v1061 = vld [vmem:[%s5 + $0x50] sm:$0xff]
        %v1062 = vld [vmem:[%s5 + $0x58] sm:$0xff]
        %v1063 = vld [vmem:[%s5 + $0x60] sm:$0xff]
        %v1064 = vld [vmem:[%s5 + $0x68] sm:$0xff]
        %v1065 = vld [vmem:[%s5 + $0x70] sm:$0xff]
        %v1066 = vld [vmem:[%s5 + $0x78] sm:$0xff]
        %v1067 = vld [vmem:[%s5 + $0x80] sm:$0xff]
        %v1068 = vld [vmem:[%s5 + $0x88] sm:$0xff]
        %v1069 = vld [vmem:[%s6] sm:$0xff]
        %v1070 = vld [vmem:[%s6 + $0x8] sm:$0xff]
        %v1071 = vld [vmem:[%s6 + $0x10] sm:$0xff]
        %v1072 = vld [vmem:[%s6 + $0x18] sm:$0xff]
        %v1073 = vld [vmem:[%s6 + $0x20] sm:$0xff]
        %v1074 = vld [vmem:[%s6 + $0x28] sm:$0xff]
        %v1075 = vld [vmem:[%s6 + $0x30] sm:$0xff]
        %v1076 = vld [vmem:[%s6 + $0x38] sm:$0xff]
        %v1077 = vld [vmem:[%s6 + $0x40] sm:$0xff]
        %v1078 = vld [vmem:[%s6 + $0x48] sm:$0xff]
        %v1079 = vld [vmem:[%s6 + $0x50] sm:$0xff]
        %v1080 = vld [vmem:[%s6 + $0x58] sm:$0xff]
        %v1081 = vld [vmem:[%s6 + $0x60] sm:$0xff]
        %v1082 = vld [vmem:[%s6 + $0x68] sm:$0xff]
        %v1083 = vld [vmem:[%s6 + $0x70] sm:$0xff]
        %v1084 = vld [vmem:[%s6 + $0x78] sm:$0xff]
        %v1085 = vld [vmem:[%s6 + $0x80] sm:$0xff]
        %v1086 = vld [vmem:[%s6 + $0x88] sm:$0xff]
        %v1088 = vsel %vm918, %v983, 0
        %v1091 = vsel %vm918, %v984, 0
        %1093 = vmatprep.subr.mxu0 0.0
        %1094 = vmatpush1.msra.mxu0 %v1084
        %1095 = vmatprep.subr.mxu0 0.0
        %1096 = vmatpush1.msra.mxu0 %v1083
        %1097 = vmatprep.subr.mxu0 0.0
        %1098 = vmatpush1.msra.mxu0 %v1082
        %1099 = vmatprep.subr.mxu0 0.0
        %1100 = vmatpush1.msra.mxu0 %v1081
        %1101 = vmatprep.subr.mxu0 0.0
        %1102 = vmatpush1.msra.mxu0 %v1080
        %1103 = vmatprep.subr.mxu0 0.0
        %1104 = vmatpush1.msra.mxu0 %v1079
        %1105 = vmatprep.subr.mxu0 0.0
        %1106 = vmatpush1.msra.mxu0 %v1078
        %1107 = vmatprep.subr.mxu0 0.0
        %1108 = vmatpush1.msra.mxu0 %v1077
        %1109 = vmatprep.subr.mxu0 0.0
        %1110 = vmatpush1.msra.mxu0 %v1076
        %1111 = vmatprep.subr.mxu0 0.0
        %1112 = vmatpush1.msra.mxu0 %v1075
        %1113 = vmatprep.subr.mxu0 0.0
        %1114 = vmatpush1.msra.mxu0 %v1074
        %1115 = vmatprep.subr.mxu0 0.0
        %1116 = vmatpush1.msra.mxu0 %v1073
        %1117 = vmatprep.subr.mxu0 0.0
        %1118 = vmatpush1.msra.mxu0 %v1072
        %1119 = vmatprep.subr.mxu0 0.0
        %1120 = vmatpush1.msra.mxu0 %v1071
        %1121 = vmatprep.subr.mxu0 0.0
        %1122 = vmatpush1.msra.mxu0 %v1070
        %1123 = vmatprep.subr.mxu0 0.0
        %1124 = vmatpush1.msra.mxu0 %v1069
        %1125 = vmatprep.subr.mxu0 0.0
        %1126 = vmatpush2.msra.mxu0 0.0
        %1127 = vmatprep.subr.mxu0 0.0
        %1128 = vmatpush2.msra.mxu0 0.0
        %1129 = vmatprep.subr.mxu0 0.0
        %1130 = vmatpush2.msra.mxu0 0.0
        %1131 = vmatprep.subr.mxu0 0.0
        %1132 = vmatpush2.msra.mxu0 0.0
        %1133 = vmatprep.subr.mxu0 0.0
        %1134 = vmatpush2.msra.mxu0 0.0
        %1135 = vmatprep.subr.mxu0 0.0
        %1136 = vmatpush2.msra.mxu0 0.0
        %1137 = vmatprep.subr.mxu0 0.0
        %1138 = vmatpush2.msra.mxu0 0.0
        %1139 = vmatprep.subr.mxu0 0.0
        %1140 = vmatpush2.msra.mxu0 0.0
        %1141 = vmatprep.subr.mxu0 0.0
        %1142 = vmatpush2.msra.mxu0 0.0
        %1143 = vmatprep.subr.mxu0 0.0
        %1144 = vmatpush2.msra.mxu0 0.0
        %1145 = vmatprep.subr.mxu0 0.0
        %1146 = vmatpush2.msra.mxu0 0.0
        %1147 = vmatprep.subr.mxu0 0.0
        %1148 = vmatpush2.msra.mxu0 0.0
        %1149 = vmatprep.subr.mxu0 0.0
        %1150 = vmatpush2.msra.mxu0 0.0
        %1151 = vmatprep.subr.mxu0 0.0
        %1152 = vmatpush2.msra.mxu0 0.0
        %1153 = vmatprep.subr.mxu0 0.0
        %1154 = vmatpush2.msra.mxu0 %v1086
        %1155 = vmatprep.subr.mxu0 0.0
        %1156 = vmatpush2.msra.mxu0 %v1085
        %1157 = vmatprep.mubr.f32.mxu0 %v1088
        %1158 = vmatmul.mubr.f32.gmra.mxu0 %v1049
        %v1159 = vpop.f32.mrf.mxu0
        %v1160 = vadd.f32 0.0, %v1159
        %v1161 = vpop.f32.mrf.mxu0
        %1162 = vmatprep.mubr.f32.mxu0 %v1091
        %1163 = vmatmul.mubr.f32.gmra.mxu0 %v1050
        %v1164 = vpop.f32.mrf.mxu0
        %v1165 = vadd.f32 0.0, %v1164
        %v1166 = vpop.f32.mrf.mxu0
        %1167 = vdwg.mxu0
        %v1169 = vsel %vm918, %v864, 0
        %v1172 = vsel %vm918, %v865, 0
        %1174 = vmatprep.subr.mxu0 0.0
        %1175 = vmatpush1.msra.mxu0 %v1066
        %1176 = vmatprep.subr.mxu0 0.0
        %1177 = vmatpush1.msra.mxu0 %v1065
        %1178 = vmatprep.subr.mxu0 0.0
        %1179 = vmatpush1.msra.mxu0 %v1064
        %1180 = vmatprep.subr.mxu0 0.0
        %1181 = vmatpush1.msra.mxu0 %v1063
        %1182 = vmatprep.subr.mxu0 0.0
        %1183 = vmatpush1.msra.mxu0 %v1062
        %1184 = vmatprep.subr.mxu0 0.0
        %1185 = vmatpush1.msra.mxu0 %v1061
        %1186 = vmatprep.subr.mxu0 0.0
        %1187 = vmatpush1.msra.mxu0 %v1060
        %1188 = vmatprep.subr.mxu0 0.0
        %1189 = vmatpush1.msra.mxu0 %v1059
        %1190 = vmatprep.subr.mxu0 0.0
        %1191 = vmatpush1.msra.mxu0 %v1058
        %1192 = vmatprep.subr.mxu0 0.0
        %1193 = vmatpush1.msra.mxu0 %v1057
        %1194 = vmatprep.subr.mxu0 0.0
        %1195 = vmatpush1.msra.mxu0 %v1056
        %1196 = vmatprep.subr.mxu0 0.0
        %1197 = vmatpush1.msra.mxu0 %v1055
        %1198 = vmatprep.subr.mxu0 0.0
        %1199 = vmatpush1.msra.mxu0 %v1054
        %1200 = vmatprep.subr.mxu0 0.0
        %1201 = vmatpush1.msra.mxu0 %v1053
        %1202 = vmatprep.subr.mxu0 0.0
        %1203 = vmatpush1.msra.mxu0 %v1052
        %1204 = vmatprep.subr.mxu0 0.0
        %1205 = vmatpush1.msra.mxu0 %v1051
        %1206 = vmatprep.subr.mxu0 0.0
        %1207 = vmatpush2.msra.mxu0 0.0
        %1208 = vmatprep.subr.mxu0 0.0
        %1209 = vmatpush2.msra.mxu0 0.0
        %1210 = vmatprep.subr.mxu0 0.0
        %1211 = vmatpush2.msra.mxu0 0.0
        %1212 = vmatprep.subr.mxu0 0.0
        %1213 = vmatpush2.msra.mxu0 0.0
        %1214 = vmatprep.subr.mxu0 0.0
        %1215 = vmatpush2.msra.mxu0 0.0
        %1216 = vmatprep.subr.mxu0 0.0
        %1217 = vmatpush2.msra.mxu0 0.0
        %1218 = vmatprep.subr.mxu0 0.0
        %1219 = vmatpush2.msra.mxu0 0.0
        %1220 = vmatprep.subr.mxu0 0.0
        %1221 = vmatpush2.msra.mxu0 0.0
        %1222 = vmatprep.subr.mxu0 0.0
        %1223 = vmatpush2.msra.mxu0 0.0
        %1224 = vmatprep.subr.mxu0 0.0
        %1225 = vmatpush2.msra.mxu0 0.0
        %1226 = vmatprep.subr.mxu0 0.0
        %1227 = vmatpush2.msra.mxu0 0.0
        %1228 = vmatprep.subr.mxu0 0.0
        %1229 = vmatpush2.msra.mxu0 0.0
        %1230 = vmatprep.subr.mxu0 0.0
        %1231 = vmatpush2.msra.mxu0 0.0
        %1232 = vmatprep.subr.mxu0 0.0
        %1233 = vmatpush2.msra.mxu0 0.0
        %1234 = vmatprep.subr.mxu0 0.0
        %1235 = vmatpush2.msra.mxu0 %v1068
        %1236 = vmatprep.subr.mxu0 0.0
        %1237 = vmatpush2.msra.mxu0 %v1067
        %1238 = vmatprep.mubr.f32.mxu0 %v1169
        %1239 = vmatmul.mubr.f32.gmra.mxu0 %v934
        %v1240 = vpop.f32.mrf.mxu0
        %v1241 = vadd.f32 %v1160, %v1240
        %v1242 = vpop.f32.mrf.mxu0
        %1243 = vmatprep.mubr.f32.mxu0 %v1172
        %1244 = vmatmul.mubr.f32.gmra.mxu0 %v935
        %v1245 = vpop.f32.mrf.mxu0
        %v1246 = vadd.f32 %v1165, %v1245
        %v1247 = vpop.f32.mrf.mxu0
        %1248 = vdwg.mxu0
        %v1249 = vld [vmem:[%s7] sm:$0x1]
        %v1251 = vlaneseq
        %v1252 = vshrl.u32 %v1251, 7
        %v1253 = vsub.s32 0, %v1252
        %v1254 = vrot.slane %v1249, %v1253
        %v1256 = vadd.f32 %v1241, %v1254
        %v1257 = vadd.f32 %v1246, %v1254
        %vm1258 = vcmp.gt.f32.partialorder %v1256, 0.0
        %vm1259 = vcmp.gt.f32.partialorder %v1257, 0.0
        %v1260 = vmul.f32 %v1256, 0.1
        %v1261 = vmul.f32 %v1257, 0.1
        %v1262 = vsel %vm1258, %v1256, %v1260
        %v1263 = vsel %vm1259, %v1257, %v1261
        %1264 = vxpose.xlu0.b32.start [1/16] %v1262, 128
        %1265 = vxpose.xlu0.b32.cont [2/16] %v1263, 128
        %1266 = vxpose.xlu0.b32.cont [3/16] 0.0, 128
        %1267 = vxpose.xlu0.b32.cont [4/16] 0.0, 128
        %1268 = vxpose.xlu0.b32.cont [5/16] 0.0, 128
        %1269 = vxpose.xlu0.b32.cont [6/16] 0.0, 128
        %1270 = vxpose.xlu0.b32.cont [7/16] 0.0, 128
        %1271 = vxpose.xlu0.b32.cont [8/16] 0.0, 128
        %1272 = vxpose.xlu0.b32.cont [9/16] 0.0, 128
        %1273 = vxpose.xlu0.b32.cont [10/16] 0.0, 128
        %1274 = vxpose.xlu0.b32.cont [11/16] 0.0, 128
        %1275 = vxpose.xlu0.b32.cont [12/16] 0.0, 128
        %1276 = vxpose.xlu0.b32.cont [13/16] 0.0, 128
        %1277 = vxpose.xlu0.b32.cont [14/16] 0.0, 128
        %1278 = vxpose.xlu0.b32.cont [15/16] 0.0, 128
        %1279 = vxpose.xlu0.b32.end [16/16] 0.0, 128
        %v1280 = vpop.trf.xlu0
        %v1281 = vpop.trf.xlu0
        %v1282 = vpop.trf.xlu0
        %v1283 = vpop.trf.xlu0
        %v1284 = vpop.trf.xlu0
        %v1285 = vpop.trf.xlu0
        %v1286 = vpop.trf.xlu0
        %v1287 = vpop.trf.xlu0
        %v1288 = vpop.trf.xlu0
        %v1289 = vpop.trf.xlu0
        %v1290 = vpop.trf.xlu0
        %v1291 = vpop.trf.xlu0
        %v1292 = vpop.trf.xlu0
        %v1293 = vpop.trf.xlu0
        %v1294 = vpop.trf.xlu0
        %v1295 = vpop.trf.xlu0
        %1296 = vst.msk [vmem:[%s313] sm:$0xff] %vm918, %v1280
        %1297 = vst.msk [vmem:[%s313 + $0x8] sm:$0xff] %vm918, %v1281
        %s1298 = sand.u32 %s208, 1
        %s1299 = scalar_lea.sflag [#allocation3], %s1298
        %s1300 = sand.u32 %s208, 1
        %s1301 = smul.addr %s1300, 16
        %s1302 = scalar_lea.vmem [#allocation2], %s1301
        // Predicated region
        $region53: #{tpu_custom_call.1} parent=51 // pred_check
          %p1303 = pneg %p218
        $region54: #{tpu_custom_call.1} parent=51 // pred_check_branch
          %1305 = sbr.rel (%p1303) target = $region56
        $region55: #{tpu_custom_call.1} parent=51 // pred_region
          %s1307 = ssub.s32 256, 256
          %1308 = vsyncadd %s1299, %s1307
          %s1309 = smul.addr %s22, 2
          %s1310 = smul.addr %s1309, 128
          %s1311 = scalar_lea.hbm %s8, %s1310
          %s1312 = sshll.u32 %s1302, 4
          %s1313 = int_to_ptr.vmem [resolvable:$true] %s1312
          %1318 = dma.vmem_to_hbm [thread:$0]  %s1313, 256, %s1311, %s1299, 128, 128, 8
        $region56: #{tpu_custom_call.1} parent=51 // pred_fallthru
          _
      $region52: #{tpu_custom_call.1} parent=5 // pred_fallthru
        _
      %p1319 = scmp.le.s32.totalorder 2, %s17
      // Predicated region
      $region57: #{tpu_custom_call.1} parent=5 // pred_check
        %p1320 = pneg %p1319
      $region58: #{tpu_custom_call.1} parent=5 // pred_check_branch
        %1322 = sbr.rel (%p1320) target = $region60
      $region59: #{tpu_custom_call.1} parent=5 // pred_region
        %s1323 = ssub.s32 %s17, 2
        // Predicated region
        $region61: #{tpu_custom_call.1} parent=59 // pred_check
          %p1324 = pneg %p224
        $region62: #{tpu_custom_call.1} parent=59 // pred_check_branch
          %1326 = sbr.rel (%p1324) target = $region64
        $region63: #{tpu_custom_call.1} parent=59 // pred_region
          %s1327 = sand.u32 %s209, 1
          %s1328 = scalar_lea.sflag [#allocation3], %s1327
          %s1329 = sand.u32 %s209, 1
          %s1330 = smul.addr %s1329, 16
          %s1331 = scalar_lea.vmem [#allocation2], %s1330
          %1332 = dma.done %s1328, 256
        $region64: #{tpu_custom_call.1} parent=59 // pred_fallthru
          _
      $region60: #{tpu_custom_call.1} parent=5 // pred_fallthru
        _
    $region6: #{tpu_custom_call.1} parent=1 // loop_footer
      %s21 = sadd.s32 1, %s17
    $region7: #{tpu_custom_call.1} parent=1 // loop_footer_branch
      %16 = sbr.rel target = $region3
    $region8: #{tpu_custom_call.1} parent=1 // loop_exit
      _
    %1333 = vsyncpa [#allocation3], 1
    %s1334 = scalar_lea.sflag [#allocation3], 1
    %1335 = vsyncpa %s1334, 1

</llo_original>
